<compile_context>
chip_gen: v7x
topology: tpu7x:2x2x1
jax: 0.10.0
libtpu: 0.0.40
codegen_flags: <defaults>
</compile_context>

<pallas_src>
import functools

import numpy as np
import jax
import jax.numpy as jnp
from jax.experimental import pallas as pl
from jax.experimental.pallas import tpu as pltpu

BN_EPS = 1e-5
KH = KW = 3  # 3x3 convs


# ----------------------------------------------------------------------------
# Host-side constant builders (pure functions of weights / static shapes).
# ----------------------------------------------------------------------------
def _banded_conv_matrices(w_oihw, width):
    """Per kernel-row dy, build M_dy with the W-direction reflection folded in:

         M_dy[ci*W + wi, co*W + wo] = sum_{dx : reflect(wo+dx-1) == wi} w[co,ci,dy,dx]

    so the 3x3 conv (with ReflectionPad2d in W) becomes, per dy,
         acc += Y_dy @ M_dy,  Y_dy[n*H+h, ci*W+wi] = y[n, ci, reflect(h+dy-1), wi].
    K is exactly Cin*W (no padded columns -> lane-aligned for Cin in {4, 8})."""
    cout, cin, kh, kw = w_oihw.shape
    m = np.zeros((kh, cin, width, cout, width), np.float32)
    w_np = np.asarray(w_oihw, np.float32)
    for dy in range(kh):
        for dx in range(kw):
            for wo in range(width):
                wi = wo + dx - 1
                if wi < 0:
                    wi = 1                      # left reflect
                elif wi >= width:
                    wi = width - 2              # right reflect
                m[dy, :, wi, :, wo] += w_np[:, :, dy, dx].T   # (Cin, Cout)
    return m.reshape(kh, cin * width, cout * width)


def _row_shift_matrices(n, h):
    """0/1 matrices so (S_dn @ y)[n*H+h] = y[n*H + reflect(h-1)] and
    (S_up @ y)[n*H+h] = y[n*H + reflect(h+1)] -- the H-direction reflection pad,
    done on the MXU instead of sublane rotations / misaligned slices."""
    nh = n * h
    s_dn = np.zeros((nh, nh), np.float32)
    s_up = np.zeros((nh, nh), np.float32)
    for r in range(nh):
        hh = r % h
        s_dn[r, r - 1 if hh > 0 else r + 1] = 1.0
        s_up[r, r + 1 if hh < h - 1 else r - 1] = 1.0
    return s_dn, s_up


def _segment_matrix(cout, width):
    """Block-diagonal (Cout*W, Cout*W) of all-ones WxW blocks: one matmul with it
    turns a (1, Cout*W) row of lane values into per-channel sums that are already
    broadcast back across each channel's W lanes."""
    return np.kron(np.eye(cout, dtype=np.float32),
                   np.ones((width, width), np.float32))


# ----------------------------------------------------------------------------
# The fused kernel (no grid, no scratch -- everything lives in vregs).
# ----------------------------------------------------------------------------
def _base_ms_kernel(x_ref, sdn_ref, sup_ref,
                    m1_ref, m2_ref, m3_ref,
                    seg1_ref, seg2_ref,
                    g1_ref, b1_ref, g2_ref, b2_ref, g3_ref, b3_ref,
                    o_ref, *, inv_cnt):
    f32, bf16 = jnp.float32, jnp.bfloat16
    s_dn = sdn_ref[...]            # (NH, NH) bf16 0/1 shift matrices (exact)
    s_up = sup_ref[...]

    def conv(y_bf, m_ref):
        # 3x3 conv on the lane-dense slab: 3 banded matmuls (one per kernel row).
        # The h-1 / h+1 reflected rows come from tiny MXU shift matmuls, keeping
        # the XLU and vector-store slots idle.
        y_dn = jnp.dot(s_dn, y_bf, preferred_element_type=f32).astype(bf16)
        y_up = jnp.dot(s_up, y_bf, preferred_element_type=f32).astype(bf16)
        acc = jnp.dot(y_dn, m_ref[0], preferred_element_type=f32)
        acc = acc + jnp.dot(y_bf, m_ref[1], preferred_element_type=f32)
        acc = acc + jnp.dot(y_up, m_ref[2], preferred_element_type=f32)
        return acc                                        # (NH, Cout*W) f32

    def bn_relu(acc, seg_ref, g_ref, b_ref):
        # Training-mode BatchNorm2d (biased batch variance over N,H,W) + ReLU,
        # vectorized over all channels.  Two-pass (mean-subtracted) variance to
        # avoid E[x^2]-E[x]^2 cancellation.  All statistics math in f32.
        seg = seg_ref[...]
        s1 = jnp.sum(acc, axis=0, keepdims=True)                       # (1, CW)
        mean = jnp.dot(s1, seg, preferred_element_type=f32) * inv_cnt  # lane-broadcast per-channel
        cen = acc - mean
        s2 = jnp.sum(cen * cen, axis=0, keepdims=True)
        var = jnp.dot(s2, seg, preferred_element_type=f32) * inv_cnt
        scale = g_ref[...] * jax.lax.rsqrt(var + BN_EPS)               # (1, CW)
        return jnp.maximum(cen * scale + b_ref[...], 0.0)              # (NH, CW)

    y = x_ref[...].astype(bf16)                                          # (NH, Cin*W)
    y = bn_relu(conv(y, m1_ref), seg1_ref, g1_ref, b1_ref).astype(bf16)  # stage 1
    y = bn_relu(conv(y, m2_ref), seg2_ref, g2_ref, b2_ref).astype(bf16)  # stage 2
    o_ref[...] = bn_relu(conv(y, m3_ref), seg2_ref, g3_ref, b3_ref)      # stage 3


# ----------------------------------------------------------------------------
# Wrapper.
# ----------------------------------------------------------------------------
def _base_ms_call(x2d, sdn, sup, m1, m2, m3, seg1, seg2,
                  g1, b1, g2, b2, g3, b3, *, inv_cnt):
    nh = x2d.shape[0]
    cw_out = m3.shape[2]
    vmem = pl.BlockSpec(memory_space=pltpu.MemorySpace.VMEM)
    kernel = functools.partial(_base_ms_kernel, inv_cnt=inv_cnt)
    return pl.pallas_call(
        kernel,
        out_shape=jax.ShapeDtypeStruct((nh, cw_out), jnp.float32),
        in_specs=[vmem] * 14,
        out_specs=vmem,
        cost_estimate=pl.CostEstimate(
            flops=7_000_000, transcendentals=320, bytes_accessed=285_000),
    )(x2d, sdn, sup, m1, m2, m3, seg1, seg2, g1, b1, g2, b2, g3, b3)


@jax.jit
def base_ms_forward(x_nchw, packed_params):
    (m1, g1, b1), (m2, g2, b2), (m3, g3, b3) = packed_params
    N, C, H, W = x_nchw.shape
    assert m1.shape[1] == C * W and m2.shape[2] == m3.shape[2]
    c_out = m3.shape[2] // W

    # NCHW -> lane-dense (N*H, C*W); a few-KB XLA transpose, effectively free.
    x2d = x_nchw.astype(jnp.float32).transpose(0, 2, 1, 3).reshape(N * H, C * W)

    # Constant matrices (static shapes under jit -> folded into the program).
    sdn_np, sup_np = _row_shift_matrices(N, H)
    sdn = jnp.asarray(sdn_np, jnp.bfloat16)
    sup = jnp.asarray(sup_np, jnp.bfloat16)
    seg1 = jnp.asarray(_segment_matrix(m1.shape[2] // W, W), jnp.float32)
    seg2 = jnp.asarray(_segment_matrix(c_out, W), jnp.float32)

    out2d = _base_ms_call(x2d, sdn, sup, m1, m2, m3, seg1, seg2,
                          g1, b1, g2, b2, g3, b3,
                          inv_cnt=1.0 / float(N * H * W))

    # Lane-dense (N*H, Cout*W) kernel output -> NCHW, permuted by XLA outside.
    return out2d.reshape(N, H, c_out, W).transpose(0, 2, 1, 3)


# ----------------------------------------------------------------------------
# Parameter init (mirrors nn.Conv2d / nn.BatchNorm2d defaults) + packing.
# ----------------------------------------------------------------------------
def init_params(key):
    """Per-stage (w_oihw, gamma, beta).  The Conv2d bias is omitted: a per-channel
    constant is exactly cancelled by BatchNorm's batch-mean subtraction, so the
    forward output is unchanged."""
    specs = [(4, 4), (4, 8), (8, 8)]
    params = []
    for i, (cin, cout) in enumerate(specs):
        kw, _ = jax.random.split(jax.random.fold_in(key, i))
        bound = 1.0 / np.sqrt(cin * KH * KW)
        w_oihw = jax.random.uniform(kw, (cout, cin, KH, KW), jnp.float32,
                                    minval=-bound, maxval=bound)
        gamma = jnp.ones((cout,), jnp.float32)
        beta = jnp.zeros((cout,), jnp.float32)
        params.append((w_oihw, gamma, beta))
    return params


def pack_params(params, width):
    """One-time host preprocessing: conv weights -> bf16 banded matmul matrices
    (W-reflection folded in), gamma/beta -> lane-broadcast (1, Cout*W) rows."""
    packed = []
    for (w_oihw, gamma, beta) in params:
        m = jnp.asarray(_banded_conv_matrices(np.asarray(w_oihw), width),
                        jnp.bfloat16)
        g_b = jnp.repeat(jnp.asarray(gamma, jnp.float32), width)[None, :]
        b_b = jnp.repeat(jnp.asarray(beta, jnp.float32), width)[None, :]
        packed.append((m, g_b, b_b))
    return packed


# ----------------------------------------------------------------------------
# Plain-JAX reference (validation only).
# ----------------------------------------------------------------------------
def reference_forward(x_nchw, params):
    y = x_nchw.astype(jnp.float32)
    for (w, gamma, beta) in params:
        yp = jnp.pad(y, ((0, 0), (0, 0), (1, 1), (1, 1)), mode="reflect")
        y = jax.lax.conv_general_dilated(
            yp, w, window_strides=(1, 1), padding="VALID",
            dimension_numbers=("NCHW", "OIHW", "NCHW"),
            precision=jax.lax.Precision.HIGHEST)
        mean = jnp.mean(y, axis=(0, 2, 3), keepdims=True)
        var = jnp.mean((y - mean) ** 2, axis=(0, 2, 3), keepdims=True)
        y = (y - mean) * jax.lax.rsqrt(var + BN_EPS)
        y = y * gamma.reshape(1, -1, 1, 1) + beta.reshape(1, -1, 1, 1)
        y = jnp.maximum(y, 0.0)
    return y


if __name__ == "__main__":
    key = jax.random.PRNGKey(0)
    kx, kp = jax.random.split(key)
    x = jax.random.normal(kx, (2, 4, 16, 16), jnp.float32)   # NCHW, like PyTorch
    params = init_params(kp)
    packed = pack_params(params, width=x.shape[-1])

    out = jax.block_until_ready(base_ms_forward(x, packed))

    assert out.shape == (2, 8, 16, 16), out.shape
    assert out.dtype == jnp.float32
    assert bool(jnp.all(jnp.isfinite(out)))
    assert bool(jnp.all(out >= 0.0))          # ReLU output

    ref = jax.block_until_ready(reference_forward(x, params))
    max_diff = float(jnp.max(jnp.abs(out - ref)))
    mean_diff = float(jnp.mean(jnp.abs(out - ref)))
    # bf16 conv-matmul operands (3 stacked conv+BN stages) vs an f32
    # Precision.HIGHEST reference -> relaxed but still-meaningful tolerances.
    assert max_diff < 7e-2, f"mismatch vs reference: max |diff| = {max_diff}"
    assert mean_diff < 1e-2, f"mismatch vs reference: mean |diff| = {mean_diff}"

    print("KERNEL_OK")
</pallas_src>

<mosaic_0001>
module attributes {stable_mosaic.version = 11 : i64} {
  func.func @_base_ms_kernel(%arg0: memref<32x64xf32, #tpu.memory_space<vmem>>, %arg1: memref<32x32xbf16, #tpu.memory_space<vmem>>, %arg2: memref<32x32xbf16, #tpu.memory_space<vmem>>, %arg3: memref<3x64x64xbf16, #tpu.memory_space<vmem>>, %arg4: memref<3x64x128xbf16, #tpu.memory_space<vmem>>, %arg5: memref<3x128x128xbf16, #tpu.memory_space<vmem>>, %arg6: memref<64x64xf32, #tpu.memory_space<vmem>>, %arg7: memref<128x128xf32, #tpu.memory_space<vmem>>, %arg8: memref<1x64xf32, #tpu.memory_space<vmem>>, %arg9: memref<1x64xf32, #tpu.memory_space<vmem>>, %arg10: memref<1x128xf32, #tpu.memory_space<vmem>>, %arg11: memref<1x128xf32, #tpu.memory_space<vmem>>, %arg12: memref<1x128xf32, #tpu.memory_space<vmem>>, %arg13: memref<1x128xf32, #tpu.memory_space<vmem>>, %arg14: memref<32x128xf32, #tpu.memory_space<vmem>>) attributes {dimension_semantics = [], scalar_prefetch = 0 : i64, scratch_operands = 0 : i64, tpu.core_type = #tpu.core_type<tc>} {
    %c0 = arith.constant 0 : index
    %c0_0 = arith.constant 0 : index
    %0 = vector.load %arg1[%c0, %c0_0] : memref<32x32xbf16, #tpu.memory_space<vmem>>, vector<32x32xbf16>
    %c0_1 = arith.constant 0 : index
    %c0_2 = arith.constant 0 : index
    %1 = vector.load %arg2[%c0_1, %c0_2] : memref<32x32xbf16, #tpu.memory_space<vmem>>, vector<32x32xbf16>
    %c0_3 = arith.constant 0 : index
    %c0_4 = arith.constant 0 : index
    %2 = vector.load %arg0[%c0_3, %c0_4] : memref<32x64xf32, #tpu.memory_space<vmem>>, vector<32x64xf32>
    %3 = arith.truncf %2 : vector<32x64xf32> to vector<32x64xbf16>
    %cst = arith.constant dense<0.000000e+00> : vector<32x64xf32>
    %4 = tpu.matmul %0, %3, %cst {dimension_numbers = #tpu.dot_dimension_numbers<[1], [0], [0], [1], [0, 0, 1, 1], [], []>} : vector<32x32xbf16>, vector<32x64xbf16>, vector<32x64xf32> -> vector<32x64xf32>
    %5 = arith.truncf %4 : vector<32x64xf32> to vector<32x64xbf16>
    %cst_5 = arith.constant dense<0.000000e+00> : vector<32x64xf32>
    %6 = tpu.matmul %1, %3, %cst_5 {dimension_numbers = #tpu.dot_dimension_numbers<[1], [0], [0], [1], [0, 0, 1, 1], [], []>} : vector<32x32xbf16>, vector<32x64xbf16>, vector<32x64xf32> -> vector<32x64xf32>
    %7 = arith.truncf %6 : vector<32x64xf32> to vector<32x64xbf16>
    %c0_6 = arith.constant 0 : index
    %c0_7 = arith.constant 0 : index
    %c0_8 = arith.constant 0 : index
    %8 = vector.load %arg3[%c0_6, %c0_7, %c0_8] : memref<3x64x64xbf16, #tpu.memory_space<vmem>>, vector<1x64x64xbf16>
    %9 = vector.shape_cast %8 : vector<1x64x64xbf16> to vector<64x64xbf16>
    %cst_9 = arith.constant dense<0.000000e+00> : vector<32x64xf32>
    %10 = tpu.matmul %5, %9, %cst_9 {dimension_numbers = #tpu.dot_dimension_numbers<[1], [0], [0], [1], [0, 0, 1, 1], [], []>} : vector<32x64xbf16>, vector<64x64xbf16>, vector<32x64xf32> -> vector<32x64xf32>
    %c1 = arith.constant 1 : index
    %c0_10 = arith.constant 0 : index
    %c0_11 = arith.constant 0 : index
    %11 = vector.load %arg3[%c1, %c0_10, %c0_11] : memref<3x64x64xbf16, #tpu.memory_space<vmem>>, vector<1x64x64xbf16>
    %12 = vector.shape_cast %11 : vector<1x64x64xbf16> to vector<64x64xbf16>
    %cst_12 = arith.constant dense<0.000000e+00> : vector<32x64xf32>
    %13 = tpu.matmul %3, %12, %cst_12 {dimension_numbers = #tpu.dot_dimension_numbers<[1], [0], [0], [1], [0, 0, 1, 1], [], []>} : vector<32x64xbf16>, vector<64x64xbf16>, vector<32x64xf32> -> vector<32x64xf32>
    %14 = arith.addf %10, %13 : vector<32x64xf32>
    %c2 = arith.constant 2 : index
    %c0_13 = arith.constant 0 : index
    %c0_14 = arith.constant 0 : index
    %15 = vector.load %arg3[%c2, %c0_13, %c0_14] : memref<3x64x64xbf16, #tpu.memory_space<vmem>>, vector<1x64x64xbf16>
    %16 = vector.shape_cast %15 : vector<1x64x64xbf16> to vector<64x64xbf16>
    %cst_15 = arith.constant dense<0.000000e+00> : vector<32x64xf32>
    %17 = tpu.matmul %7, %16, %cst_15 {dimension_numbers = #tpu.dot_dimension_numbers<[1], [0], [0], [1], [0, 0, 1, 1], [], []>} : vector<32x64xbf16>, vector<64x64xbf16>, vector<32x64xf32> -> vector<32x64xf32>
    %18 = arith.addf %14, %17 : vector<32x64xf32>
    %c0_16 = arith.constant 0 : index
    %c0_17 = arith.constant 0 : index
    %19 = vector.load %arg6[%c0_16, %c0_17] : memref<64x64xf32, #tpu.memory_space<vmem>>, vector<64x64xf32>
    %cst_18 = arith.constant dense<0.000000e+00> : vector<64xf32>
    %20 = vector.multi_reduction <add>, %18, %cst_18 [0] : vector<32x64xf32> to vector<64xf32>
    %21 = vector.shape_cast %20 : vector<64xf32> to vector<1x64xf32>
    %cst_19 = arith.constant dense<0.000000e+00> : vector<1x64xf32>
    %22 = tpu.matmul %21, %19, %cst_19 {dimension_numbers = #tpu.dot_dimension_numbers<[1], [0], [0], [1], [0, 0, 1, 1], [], []>} : vector<1x64xf32>, vector<64x64xf32>, vector<1x64xf32> -> vector<1x64xf32>
    %cst_20 = arith.constant 0.001953125 : f32
    %23 = vector.broadcast %cst_20 : f32 to vector<1x64xf32>
    %24 = arith.mulf %22, %23 : vector<1x64xf32>
    %25 = vector.broadcast %24 : vector<1x64xf32> to vector<32x64xf32>
    %26 = arith.subf %18, %25 : vector<32x64xf32>
    %27 = arith.mulf %26, %26 : vector<32x64xf32>
    %cst_21 = arith.constant dense<0.000000e+00> : vector<64xf32>
    %28 = vector.multi_reduction <add>, %27, %cst_21 [0] : vector<32x64xf32> to vector<64xf32>
    %29 = vector.shape_cast %28 : vector<64xf32> to vector<1x64xf32>
    %cst_22 = arith.constant dense<0.000000e+00> : vector<1x64xf32>
    %30 = tpu.matmul %29, %19, %cst_22 {dimension_numbers = #tpu.dot_dimension_numbers<[1], [0], [0], [1], [0, 0, 1, 1], [], []>} : vector<1x64xf32>, vector<64x64xf32>, vector<1x64xf32> -> vector<1x64xf32>
    %cst_23 = arith.constant 0.001953125 : f32
    %31 = vector.broadcast %cst_23 : f32 to vector<1x64xf32>
    %32 = arith.mulf %30, %31 : vector<1x64xf32>
    %c0_24 = arith.constant 0 : index
    %c0_25 = arith.constant 0 : index
    %33 = vector.load %arg8[%c0_24, %c0_25] : memref<1x64xf32, #tpu.memory_space<vmem>>, vector<1x64xf32>
    %cst_26 = arith.constant 9.99999974E-6 : f32
    %34 = vector.broadcast %cst_26 : f32 to vector<1x64xf32>
    %35 = arith.addf %32, %34 : vector<1x64xf32>
    %36 = math.rsqrt %35 : vector<1x64xf32>
    %37 = arith.mulf %33, %36 : vector<1x64xf32>
    %38 = vector.broadcast %37 : vector<1x64xf32> to vector<32x64xf32>
    %39 = arith.mulf %26, %38 : vector<32x64xf32>
    %c0_27 = arith.constant 0 : index
    %c0_28 = arith.constant 0 : index
    %40 = vector.load %arg9[%c0_27, %c0_28] : memref<1x64xf32, #tpu.memory_space<vmem>>, vector<1x64xf32>
    %41 = vector.broadcast %40 : vector<1x64xf32> to vector<32x64xf32>
    %42 = arith.addf %39, %41 : vector<32x64xf32>
    %cst_29 = arith.constant 0.000000e+00 : f32
    %43 = vector.broadcast %cst_29 : f32 to vector<32x64xf32>
    %44 = arith.maximumf %42, %43 : vector<32x64xf32>
    %45 = arith.truncf %44 : vector<32x64xf32> to vector<32x64xbf16>
    %cst_30 = arith.constant dense<0.000000e+00> : vector<32x64xf32>
    %46 = tpu.matmul %0, %45, %cst_30 {dimension_numbers = #tpu.dot_dimension_numbers<[1], [0], [0], [1], [0, 0, 1, 1], [], []>} : vector<32x32xbf16>, vector<32x64xbf16>, vector<32x64xf32> -> vector<32x64xf32>
    %47 = arith.truncf %46 : vector<32x64xf32> to vector<32x64xbf16>
    %cst_31 = arith.constant dense<0.000000e+00> : vector<32x64xf32>
    %48 = tpu.matmul %1, %45, %cst_31 {dimension_numbers = #tpu.dot_dimension_numbers<[1], [0], [0], [1], [0, 0, 1, 1], [], []>} : vector<32x32xbf16>, vector<32x64xbf16>, vector<32x64xf32> -> vector<32x64xf32>
    %49 = arith.truncf %48 : vector<32x64xf32> to vector<32x64xbf16>
    %c0_32 = arith.constant 0 : index
    %c0_33 = arith.constant 0 : index
    %c0_34 = arith.constant 0 : index
    %50 = vector.load %arg4[%c0_32, %c0_33, %c0_34] : memref<3x64x128xbf16, #tpu.memory_space<vmem>>, vector<1x64x128xbf16>
    %51 = vector.shape_cast %50 : vector<1x64x128xbf16> to vector<64x128xbf16>
    %cst_35 = arith.constant dense<0.000000e+00> : vector<32x128xf32>
    %52 = tpu.matmul %47, %51, %cst_35 {dimension_numbers = #tpu.dot_dimension_numbers<[1], [0], [0], [1], [0, 0, 1, 1], [], []>} : vector<32x64xbf16>, vector<64x128xbf16>, vector<32x128xf32> -> vector<32x128xf32>
    %c1_36 = arith.constant 1 : index
    %c0_37 = arith.constant 0 : index
    %c0_38 = arith.constant 0 : index
    %53 = vector.load %arg4[%c1_36, %c0_37, %c0_38] : memref<3x64x128xbf16, #tpu.memory_space<vmem>>, vector<1x64x128xbf16>
    %54 = vector.shape_cast %53 : vector<1x64x128xbf16> to vector<64x128xbf16>
    %cst_39 = arith.constant dense<0.000000e+00> : vector<32x128xf32>
    %55 = tpu.matmul %45, %54, %cst_39 {dimension_numbers = #tpu.dot_dimension_numbers<[1], [0], [0], [1], [0, 0, 1, 1], [], []>} : vector<32x64xbf16>, vector<64x128xbf16>, vector<32x128xf32> -> vector<32x128xf32>
    %56 = arith.addf %52, %55 : vector<32x128xf32>
    %c2_40 = arith.constant 2 : index
    %c0_41 = arith.constant 0 : index
    %c0_42 = arith.constant 0 : index
    %57 = vector.load %arg4[%c2_40, %c0_41, %c0_42] : memref<3x64x128xbf16, #tpu.memory_space<vmem>>, vector<1x64x128xbf16>
    %58 = vector.shape_cast %57 : vector<1x64x128xbf16> to vector<64x128xbf16>
    %cst_43 = arith.constant dense<0.000000e+00> : vector<32x128xf32>
    %59 = tpu.matmul %49, %58, %cst_43 {dimension_numbers = #tpu.dot_dimension_numbers<[1], [0], [0], [1], [0, 0, 1, 1], [], []>} : vector<32x64xbf16>, vector<64x128xbf16>, vector<32x128xf32> -> vector<32x128xf32>
    %60 = arith.addf %56, %59 : vector<32x128xf32>
    %c0_44 = arith.constant 0 : index
    %c0_45 = arith.constant 0 : index
    %61 = vector.load %arg7[%c0_44, %c0_45] : memref<128x128xf32, #tpu.memory_space<vmem>>, vector<128x128xf32>
    %cst_46 = arith.constant dense<0.000000e+00> : vector<128xf32>
    %62 = vector.multi_reduction <add>, %60, %cst_46 [0] : vector<32x128xf32> to vector<128xf32>
    %63 = vector.shape_cast %62 : vector<128xf32> to vector<1x128xf32>
    %cst_47 = arith.constant dense<0.000000e+00> : vector<1x128xf32>
    %64 = tpu.matmul %63, %61, %cst_47 {dimension_numbers = #tpu.dot_dimension_numbers<[1], [0], [0], [1], [0, 0, 1, 1], [], []>} : vector<1x128xf32>, vector<128x128xf32>, vector<1x128xf32> -> vector<1x128xf32>
    %cst_48 = arith.constant 0.001953125 : f32
    %65 = vector.broadcast %cst_48 : f32 to vector<1x128xf32>
    %66 = arith.mulf %64, %65 : vector<1x128xf32>
    %67 = vector.broadcast %66 : vector<1x128xf32> to vector<32x128xf32>
    %68 = arith.subf %60, %67 : vector<32x128xf32>
    %69 = arith.mulf %68, %68 : vector<32x128xf32>
    %cst_49 = arith.constant dense<0.000000e+00> : vector<128xf32>
    %70 = vector.multi_reduction <add>, %69, %cst_49 [0] : vector<32x128xf32> to vector<128xf32>
    %71 = vector.shape_cast %70 : vector<128xf32> to vector<1x128xf32>
    %cst_50 = arith.constant dense<0.000000e+00> : vector<1x128xf32>
    %72 = tpu.matmul %71, %61, %cst_50 {dimension_numbers = #tpu.dot_dimension_numbers<[1], [0], [0], [1], [0, 0, 1, 1], [], []>} : vector<1x128xf32>, vector<128x128xf32>, vector<1x128xf32> -> vector<1x128xf32>
    %cst_51 = arith.constant 0.001953125 : f32
    %73 = vector.broadcast %cst_51 : f32 to vector<1x128xf32>
    %74 = arith.mulf %72, %73 : vector<1x128xf32>
    %c0_52 = arith.constant 0 : index
    %c0_53 = arith.constant 0 : index
    %75 = vector.load %arg10[%c0_52, %c0_53] : memref<1x128xf32, #tpu.memory_space<vmem>>, vector<1x128xf32>
    %cst_54 = arith.constant 9.99999974E-6 : f32
    %76 = vector.broadcast %cst_54 : f32 to vector<1x128xf32>
    %77 = arith.addf %74, %76 : vector<1x128xf32>
    %78 = math.rsqrt %77 : vector<1x128xf32>
    %79 = arith.mulf %75, %78 : vector<1x128xf32>
    %80 = vector.broadcast %79 : vector<1x128xf32> to vector<32x128xf32>
    %81 = arith.mulf %68, %80 : vector<32x128xf32>
    %c0_55 = arith.constant 0 : index
    %c0_56 = arith.constant 0 : index
    %82 = vector.load %arg11[%c0_55, %c0_56] : memref<1x128xf32, #tpu.memory_space<vmem>>, vector<1x128xf32>
    %83 = vector.broadcast %82 : vector<1x128xf32> to vector<32x128xf32>
    %84 = arith.addf %81, %83 : vector<32x128xf32>
    %cst_57 = arith.constant 0.000000e+00 : f32
    %85 = vector.broadcast %cst_57 : f32 to vector<32x128xf32>
    %86 = arith.maximumf %84, %85 : vector<32x128xf32>
    %87 = arith.truncf %86 : vector<32x128xf32> to vector<32x128xbf16>
    %cst_58 = arith.constant dense<0.000000e+00> : vector<32x128xf32>
    %88 = tpu.matmul %0, %87, %cst_58 {dimension_numbers = #tpu.dot_dimension_numbers<[1], [0], [0], [1], [0, 0, 1, 1], [], []>} : vector<32x32xbf16>, vector<32x128xbf16>, vector<32x128xf32> -> vector<32x128xf32>
    %89 = arith.truncf %88 : vector<32x128xf32> to vector<32x128xbf16>
    %cst_59 = arith.constant dense<0.000000e+00> : vector<32x128xf32>
    %90 = tpu.matmul %1, %87, %cst_59 {dimension_numbers = #tpu.dot_dimension_numbers<[1], [0], [0], [1], [0, 0, 1, 1], [], []>} : vector<32x32xbf16>, vector<32x128xbf16>, vector<32x128xf32> -> vector<32x128xf32>
    %91 = arith.truncf %90 : vector<32x128xf32> to vector<32x128xbf16>
    %c0_60 = arith.constant 0 : index
    %c0_61 = arith.constant 0 : index
    %c0_62 = arith.constant 0 : index
    %92 = vector.load %arg5[%c0_60, %c0_61, %c0_62] : memref<3x128x128xbf16, #tpu.memory_space<vmem>>, vector<1x128x128xbf16>
    %93 = vector.shape_cast %92 : vector<1x128x128xbf16> to vector<128x128xbf16>
    %cst_63 = arith.constant dense<0.000000e+00> : vector<32x128xf32>
    %94 = tpu.matmul %89, %93, %cst_63 {dimension_numbers = #tpu.dot_dimension_numbers<[1], [0], [0], [1], [0, 0, 1, 1], [], []>} : vector<32x128xbf16>, vector<128x128xbf16>, vector<32x128xf32> -> vector<32x128xf32>
    %c1_64 = arith.constant 1 : index
    %c0_65 = arith.constant 0 : index
    %c0_66 = arith.constant 0 : index
    %95 = vector.load %arg5[%c1_64, %c0_65, %c0_66] : memref<3x128x128xbf16, #tpu.memory_space<vmem>>, vector<1x128x128xbf16>
    %96 = vector.shape_cast %95 : vector<1x128x128xbf16> to vector<128x128xbf16>
    %cst_67 = arith.constant dense<0.000000e+00> : vector<32x128xf32>
    %97 = tpu.matmul %87, %96, %cst_67 {dimension_numbers = #tpu.dot_dimension_numbers<[1], [0], [0], [1], [0, 0, 1, 1], [], []>} : vector<32x128xbf16>, vector<128x128xbf16>, vector<32x128xf32> -> vector<32x128xf32>
    %98 = arith.addf %94, %97 : vector<32x128xf32>
    %c2_68 = arith.constant 2 : index
    %c0_69 = arith.constant 0 : index
    %c0_70 = arith.constant 0 : index
    %99 = vector.load %arg5[%c2_68, %c0_69, %c0_70] : memref<3x128x128xbf16, #tpu.memory_space<vmem>>, vector<1x128x128xbf16>
    %100 = vector.shape_cast %99 : vector<1x128x128xbf16> to vector<128x128xbf16>
    %cst_71 = arith.constant dense<0.000000e+00> : vector<32x128xf32>
    %101 = tpu.matmul %91, %100, %cst_71 {dimension_numbers = #tpu.dot_dimension_numbers<[1], [0], [0], [1], [0, 0, 1, 1], [], []>} : vector<32x128xbf16>, vector<128x128xbf16>, vector<32x128xf32> -> vector<32x128xf32>
    %102 = arith.addf %98, %101 : vector<32x128xf32>
    %c0_72 = arith.constant 0 : index
    %c0_73 = arith.constant 0 : index
    %103 = vector.load %arg7[%c0_72, %c0_73] : memref<128x128xf32, #tpu.memory_space<vmem>>, vector<128x128xf32>
    %cst_74 = arith.constant dense<0.000000e+00> : vector<128xf32>
    %104 = vector.multi_reduction <add>, %102, %cst_74 [0] : vector<32x128xf32> to vector<128xf32>
    %105 = vector.shape_cast %104 : vector<128xf32> to vector<1x128xf32>
    %cst_75 = arith.constant dense<0.000000e+00> : vector<1x128xf32>
    %106 = tpu.matmul %105, %103, %cst_75 {dimension_numbers = #tpu.dot_dimension_numbers<[1], [0], [0], [1], [0, 0, 1, 1], [], []>} : vector<1x128xf32>, vector<128x128xf32>, vector<1x128xf32> -> vector<1x128xf32>
    %cst_76 = arith.constant 0.001953125 : f32
    %107 = vector.broadcast %cst_76 : f32 to vector<1x128xf32>
    %108 = arith.mulf %106, %107 : vector<1x128xf32>
    %109 = vector.broadcast %108 : vector<1x128xf32> to vector<32x128xf32>
    %110 = arith.subf %102, %109 : vector<32x128xf32>
    %111 = arith.mulf %110, %110 : vector<32x128xf32>
    %cst_77 = arith.constant dense<0.000000e+00> : vector<128xf32>
    %112 = vector.multi_reduction <add>, %111, %cst_77 [0] : vector<32x128xf32> to vector<128xf32>
    %113 = vector.shape_cast %112 : vector<128xf32> to vector<1x128xf32>
    %cst_78 = arith.constant dense<0.000000e+00> : vector<1x128xf32>
    %114 = tpu.matmul %113, %103, %cst_78 {dimension_numbers = #tpu.dot_dimension_numbers<[1], [0], [0], [1], [0, 0, 1, 1], [], []>} : vector<1x128xf32>, vector<128x128xf32>, vector<1x128xf32> -> vector<1x128xf32>
    %cst_79 = arith.constant 0.001953125 : f32
    %115 = vector.broadcast %cst_79 : f32 to vector<1x128xf32>
    %116 = arith.mulf %114, %115 : vector<1x128xf32>
    %c0_80 = arith.constant 0 : index
    %c0_81 = arith.constant 0 : index
    %117 = vector.load %arg12[%c0_80, %c0_81] : memref<1x128xf32, #tpu.memory_space<vmem>>, vector<1x128xf32>
    %cst_82 = arith.constant 9.99999974E-6 : f32
    %118 = vector.broadcast %cst_82 : f32 to vector<1x128xf32>
    %119 = arith.addf %116, %118 : vector<1x128xf32>
    %120 = math.rsqrt %119 : vector<1x128xf32>
    %121 = arith.mulf %117, %120 : vector<1x128xf32>
    %122 = vector.broadcast %121 : vector<1x128xf32> to vector<32x128xf32>
    %123 = arith.mulf %110, %122 : vector<32x128xf32>
    %c0_83 = arith.constant 0 : index
    %c0_84 = arith.constant 0 : index
    %124 = vector.load %arg13[%c0_83, %c0_84] : memref<1x128xf32, #tpu.memory_space<vmem>>, vector<1x128xf32>
    %125 = vector.broadcast %124 : vector<1x128xf32> to vector<32x128xf32>
    %126 = arith.addf %123, %125 : vector<32x128xf32>
    %cst_85 = arith.constant 0.000000e+00 : f32
    %127 = vector.broadcast %cst_85 : f32 to vector<32x128xf32>
    %128 = arith.maximumf %126, %127 : vector<32x128xf32>
    %c0_86 = arith.constant 0 : index
    %c0_87 = arith.constant 0 : index
    %129 = vector.load %arg14[%c0_86, %c0_87] : memref<32x128xf32, #tpu.memory_space<vmem>>, vector<32x128xf32>
    tpu.vector_store %arg14[%c0_86, %c0_87], %128 {strides = array<i32>} : memref<32x128xf32, #tpu.memory_space<vmem>>, vector<32x128xf32>,
    return
  }
}

</mosaic_0001>

<llo_original>
// kernel: base_ms_forward.1
$region0: #{base_ms_forward.1}
  #allocation0 [shape = 'u32[]', space=smem, size = 0x4, offset = 0x4, fixed_abs, tag = 'smem constant byte address 0x4 - core index']
  #allocation1 [shape = 'u32[144,128]{1,0:T(1,128)}', space=vmem, size = 0x12000, scoped, tag = 'internal scratch']
  %s0 = inlined_call_operand.vmem [shape: f32[32,64], index: 0, kind: input, shape index: {}]
  %s1 = inlined_call_operand.vmem [shape: bf16[32,32], index: 1, kind: input, shape index: {}]
  %s2 = inlined_call_operand.vmem [shape: bf16[32,32], index: 2, kind: input, shape index: {}]
  %s3 = inlined_call_operand.vmem [shape: bf16[3,64,64], index: 3, kind: input, shape index: {}]
  %s4 = inlined_call_operand.hbm [shape: bf16[3,64,128], index: 4, kind: input, shape index: {}]
  %s5 = inlined_call_operand.vmem [shape: bf16[3,128,128], index: 5, kind: input, shape index: {}]
  %s6 = inlined_call_operand.hbm [shape: f32[64,64], index: 6, kind: input, shape index: {}]
  %s7 = inlined_call_operand.vmem [shape: f32[128,128], index: 7, kind: input, shape index: {}]
  %s8 = inlined_call_operand.vmem [shape: f32[1,64], index: 8, kind: input, shape index: {}]
  %s9 = inlined_call_operand.vmem [shape: f32[1,64], index: 9, kind: input, shape index: {}]
  %s10 = inlined_call_operand.vmem [shape: f32[1,128], index: 10, kind: input, shape index: {}]
  %s11 = inlined_call_operand.vmem [shape: f32[1,128], index: 11, kind: input, shape index: {}]
  %s12 = inlined_call_operand.vmem [shape: f32[1,128], index: 12, kind: input, shape index: {}]
  %s13 = inlined_call_operand.vmem [shape: f32[1,128], index: 13, kind: input, shape index: {}]
  %s14 = inlined_call_operand.vmem [shape: f32[32,128], index: 14, kind: output, shape index: {}]
  %s15 = sld [smem:[#allocation0]]
  $region74: #{base_ms_forward.1} parent=0
    _
  %s17 = ssub.s32 1, %s15
  %s18 = scalar_select 0, %s17, %s15
  $region1: #{base_ms_forward.1} parent=0
    #allocation2 [shape = 'u8[49152]{0}', space=vmem, size = 0xc000, scoped, tag = 'input window, operand 4, single buffered']
    #allocation3 [shape = 's32[1]{0}', space=sflag, size = 0x4, scoped, tag = 'scoped memory for base_ms_forward.1']
    #allocation4 [shape = 'u8[32768]{0}', space=vmem, size = 0x8000, scoped, tag = 'input window, operand 6, single buffered']
    #allocation5 [shape = 's32[1]{0}', space=sflag, size = 0x4, scoped, tag = 'scoped memory for base_ms_forward.1']
    %19 = vsyncpa [#allocation3], 0
    %20 = vsyncpa [#allocation5], 0
    // Predicated region
    $region2: #{base_ms_forward.1} parent=1 // pred_check
      _
    $region3: #{base_ms_forward.1} parent=1 // pred_check_branch
      %22 = sbr.rel (0) target = $region5
    $region4: #{base_ms_forward.1} parent=1 // pred_region
      _
    $region5: #{base_ms_forward.1} parent=1 // pred_fallthru
      _
    // Predicated region
    $region6: #{base_ms_forward.1} parent=1 // pred_check
      _
    $region7: #{base_ms_forward.1} parent=1 // pred_check_branch
      %24 = sbr.rel (0) target = $region9
    $region8: #{base_ms_forward.1} parent=1 // pred_region
      _
    $region9: #{base_ms_forward.1} parent=1 // pred_fallthru
      _
    // Predicated region
    $region10: #{base_ms_forward.1} parent=1 // pred_check
      _
    $region11: #{base_ms_forward.1} parent=1 // pred_check_branch
      %26 = sbr.rel (0) target = $region13
    $region12: #{base_ms_forward.1} parent=1 // pred_region
      _
    $region13: #{base_ms_forward.1} parent=1 // pred_fallthru
      _
    // Predicated region
    $region14: #{base_ms_forward.1} parent=1 // pred_check
      _
    $region15: #{base_ms_forward.1} parent=1 // pred_check_branch
      %28 = sbr.rel (0) target = $region17
    $region16: #{base_ms_forward.1} parent=1 // pred_region
      _
    $region17: #{base_ms_forward.1} parent=1 // pred_fallthru
      _
    // Predicated region
    $region18: #{base_ms_forward.1} parent=1 // pred_check
      _
    $region19: #{base_ms_forward.1} parent=1 // pred_check_branch
      %30 = sbr.rel (0) target = $region21
    $region20: #{base_ms_forward.1} parent=1 // pred_region
      %s32 = ssub.s32 1536, 1536
      %33 = vsyncadd [#allocation3], %s32
      %s34 = sshll.u32 [#allocation2], 4
      %s35 = int_to_ptr.vmem [resolvable:$true] %s34
      %40 = dma.hbm_to_vmem [thread:$0]  %s4, 1536, %s35, [#allocation3], 64, 64, 4
    $region21: #{base_ms_forward.1} parent=1 // pred_fallthru
      _
    // Predicated region
    $region22: #{base_ms_forward.1} parent=1 // pred_check
      _
    $region23: #{base_ms_forward.1} parent=1 // pred_check_branch
      %42 = sbr.rel (0) target = $region25
    $region24: #{base_ms_forward.1} parent=1 // pred_region
      _
    $region25: #{base_ms_forward.1} parent=1 // pred_fallthru
      _
    // Predicated region
    $region26: #{base_ms_forward.1} parent=1 // pred_check
      _
    $region27: #{base_ms_forward.1} parent=1 // pred_check_branch
      %44 = sbr.rel (0) target = $region29
    $region28: #{base_ms_forward.1} parent=1 // pred_region
      %s46 = ssub.s32 1024, 1024
      %47 = vsyncadd [#allocation5], %s46
      %s48 = sshll.u32 [#allocation4], 4
      %s49 = int_to_ptr.vmem [resolvable:$true] %s48
      %54 = dma.hbm_to_vmem [thread:$0]  %s6, 1024, %s49, [#allocation5], 128, 128, 8
    $region29: #{base_ms_forward.1} parent=1 // pred_fallthru
      _
    // Predicated region
    $region30: #{base_ms_forward.1} parent=1 // pred_check
      _
    $region31: #{base_ms_forward.1} parent=1 // pred_check_branch
      %56 = sbr.rel (0) target = $region33
    $region32: #{base_ms_forward.1} parent=1 // pred_region
      _
    $region33: #{base_ms_forward.1} parent=1 // pred_fallthru
      _
    // Predicated region
    $region34: #{base_ms_forward.1} parent=1 // pred_check
      _
    $region35: #{base_ms_forward.1} parent=1 // pred_check_branch
      %58 = sbr.rel (0) target = $region37
    $region36: #{base_ms_forward.1} parent=1 // pred_region
      _
    $region37: #{base_ms_forward.1} parent=1 // pred_fallthru
      _
    // Predicated region
    $region38: #{base_ms_forward.1} parent=1 // pred_check
      _
    $region39: #{base_ms_forward.1} parent=1 // pred_check_branch
      %60 = sbr.rel (0) target = $region41
    $region40: #{base_ms_forward.1} parent=1 // pred_region
      _
    $region41: #{base_ms_forward.1} parent=1 // pred_fallthru
      _
    // Predicated region
    $region42: #{base_ms_forward.1} parent=1 // pred_check
      _
    $region43: #{base_ms_forward.1} parent=1 // pred_check_branch
      %62 = sbr.rel (0) target = $region45
    $region44: #{base_ms_forward.1} parent=1 // pred_region
      _
    $region45: #{base_ms_forward.1} parent=1 // pred_fallthru
      _
    // Predicated region
    $region46: #{base_ms_forward.1} parent=1 // pred_check
      _
    $region47: #{base_ms_forward.1} parent=1 // pred_check_branch
      %64 = sbr.rel (0) target = $region49
    $region48: #{base_ms_forward.1} parent=1 // pred_region
      _
    $region49: #{base_ms_forward.1} parent=1 // pred_fallthru
      _
    // Predicated region
    $region50: #{base_ms_forward.1} parent=1 // pred_check
      _
    $region51: #{base_ms_forward.1} parent=1 // pred_check_branch
      %66 = sbr.rel (0) target = $region53
    $region52: #{base_ms_forward.1} parent=1 // pred_region
      _
    $region53: #{base_ms_forward.1} parent=1 // pred_fallthru
      _
    // Predicated region
    $region54: #{base_ms_forward.1} parent=1 // pred_check
      _
    $region55: #{base_ms_forward.1} parent=1 // pred_check_branch
      %68 = sbr.rel (0) target = $region57
    $region56: #{base_ms_forward.1} parent=1 // pred_region
      _
    $region57: #{base_ms_forward.1} parent=1 // pred_fallthru
      _
    // Predicated region
    $region58: #{base_ms_forward.1} parent=1 // pred_check
      _
    $region59: #{base_ms_forward.1} parent=1 // pred_check_branch
      %70 = sbr.rel (0) target = $region61
    $region60: #{base_ms_forward.1} parent=1 // pred_region
      %71 = dma.done [#allocation3], 1536
    $region61: #{base_ms_forward.1} parent=1 // pred_fallthru
      _
    // Predicated region
    $region62: #{base_ms_forward.1} parent=1 // pred_check
      _
    $region63: #{base_ms_forward.1} parent=1 // pred_check_branch
      %73 = sbr.rel (0) target = $region65
    $region64: #{base_ms_forward.1} parent=1 // pred_region
      %74 = dma.done [#allocation5], 1024
    $region65: #{base_ms_forward.1} parent=1 // pred_fallthru
      _
    %v76 = vld [vmem:[%s1] sm:$0xf]
    %v77 = vld [vmem:[%s1 + $0x4] sm:$0xf]
    %v78 = vld [vmem:[%s1 + $0x8] sm:$0xf]
    %v79 = vld [vmem:[%s1 + $0xc] sm:$0xf]
    %v80 = vld [vmem:[%s2] sm:$0xf]
    %v81 = vld [vmem:[%s2 + $0x4] sm:$0xf]
    %v82 = vld [vmem:[%s2 + $0x8] sm:$0xf]
    %v83 = vld [vmem:[%s2 + $0xc] sm:$0xf]
    %v84 = vld [vmem:[%s0] sm:$0xff]
    %v85 = vld [vmem:[%s0 + $0x8] sm:$0xff]
    %v86 = vld [vmem:[%s0 + $0x10] sm:$0xff]
    %v87 = vld [vmem:[%s0 + $0x18] sm:$0xff]
    %v88 = vpack.c.bf16 %v85, %v84
    %v89 = vpack.c.bf16 %v87, %v86
    %v94 = vunpack.c.l.b16 %v76
    %v95 = vunpack.c.l.b16 %v77
    %v96 = vunpack.c.l.b16 %v78
    %v97 = vunpack.c.l.b16 %v79
    %v98 = vpack.c.b16 %v95, %v94
    %v99 = vpack.c.b16 %v97, %v96
    %vm100 = vcmask 261120
    %v102 = vsel %vm100, %v98, 0
    %v105 = vsel %vm100, %v99, 0
    %107 = vmatprep.subr.bf16.mxu0 0
    %108 = vmatpush1.bf16.msra.mxu0 %v88
    %109 = vmatprep.subr.bf16.mxu0 0
    %110 = vmatpush1.bf16.msra.mxu0 %v89
    %111 = vmatprep.subr.bf16.mxu0 0
    %112 = vmatpush1.bf16.msra.mxu0 0
    %113 = vmatprep.subr.bf16.mxu0 0
    %114 = vmatpush1.bf16.msra.mxu0 0
    %115 = vmatprep.subr.bf16.mxu0 0
    %116 = vmatpush1.bf16.msra.mxu0 0
    %117 = vmatprep.subr.bf16.mxu0 0
    %118 = vmatpush1.bf16.msra.mxu0 0
    %119 = vmatprep.subr.bf16.mxu0 0
    %120 = vmatpush1.bf16.msra.mxu0 0
    %121 = vmatprep.subr.bf16.mxu0 0
    %122 = vmatpush1.bf16.msra.mxu0 0
    %123 = vmatprep.subr.bf16.mxu0 0
    %124 = vmatpush1.bf16.msra.mxu0 0
    %125 = vmatprep.subr.bf16.mxu0 0
    %126 = vmatpush1.bf16.msra.mxu0 0
    %127 = vmatprep.subr.bf16.mxu0 0
    %128 = vmatpush1.bf16.msra.mxu0 0
    %129 = vmatprep.subr.bf16.mxu0 0
    %130 = vmatpush1.bf16.msra.mxu0 0
    %131 = vmatprep.subr.bf16.mxu0 0
    %132 = vmatpush1.bf16.msra.mxu0 0
    %133 = vmatprep.subr.bf16.mxu0 0
    %134 = vmatpush1.bf16.msra.mxu0 0
    %135 = vmatprep.subr.bf16.mxu0 0
    %136 = vmatpush1.bf16.msra.mxu0 0
    %137 = vmatprep.subr.bf16.mxu0 0
    %138 = vmatpush1.bf16.msra.mxu0 0
    %139 = vmatprep.mubr.bf16.mxu0 0
    %140 = vmatmul.mubr.bf16.gmra.mrb[0].mxu0 %v102
    %v141 = vpop.f32.mrb[0].mxu0
    %v142 = vadd.f32 0.0, %v141
    %v143 = vpop.f32.mrb[0].mxu0
    %v144 = vpop.f32.mrb[0].mxu0
    %v145 = vadd.f32 0.0, %v144
    %v146 = vpop.f32.mrb[0].mxu0
    %147 = vmatprep.mubr.bf16.mxu0 0
    %148 = vmatmul.mubr.bf16.gmra.mrb[0].mxu0 %v105
    %v149 = vpop.f32.mrb[0].mxu0
    %v150 = vadd.f32 0.0, %v149
    %v151 = vpop.f32.mrb[0].mxu0
    %v152 = vpop.f32.mrb[0].mxu0
    %v153 = vadd.f32 0.0, %v152
    %v154 = vpop.f32.mrb[0].mxu0
    %155 = vdwg.mxu0
    %v156 = vpack.c.bf16 %v145, %v142
    %v157 = vpack.c.bf16 %v153, %v150
    %v162 = vunpack.c.l.b16 %v80
    %v163 = vunpack.c.l.b16 %v81
    %v164 = vunpack.c.l.b16 %v82
    %v165 = vunpack.c.l.b16 %v83
    %v166 = vpack.c.b16 %v163, %v162
    %v167 = vpack.c.b16 %v165, %v164
    %v169 = vsel %vm100, %v166, 0
    %v172 = vsel %vm100, %v167, 0
    %174 = vmatprep.subr.bf16.mxu0 0
    %175 = vmatpush1.bf16.msra.mxu0 %v88
    %176 = vmatprep.subr.bf16.mxu0 0
    %177 = vmatpush1.bf16.msra.mxu0 %v89
    %178 = vmatprep.subr.bf16.mxu0 0
    %179 = vmatpush1.bf16.msra.mxu0 0
    %180 = vmatprep.subr.bf16.mxu0 0
    %181 = vmatpush1.bf16.msra.mxu0 0
    %182 = vmatprep.subr.bf16.mxu0 0
    %183 = vmatpush1.bf16.msra.mxu0 0
    %184 = vmatprep.subr.bf16.mxu0 0
    %185 = vmatpush1.bf16.msra.mxu0 0
    %186 = vmatprep.subr.bf16.mxu0 0
    %187 = vmatpush1.bf16.msra.mxu0 0
    %188 = vmatprep.subr.bf16.mxu0 0
    %189 = vmatpush1.bf16.msra.mxu0 0
    %190 = vmatprep.subr.bf16.mxu0 0
    %191 = vmatpush1.bf16.msra.mxu0 0
    %192 = vmatprep.subr.bf16.mxu0 0
    %193 = vmatpush1.bf16.msra.mxu0 0
    %194 = vmatprep.subr.bf16.mxu0 0
    %195 = vmatpush1.bf16.msra.mxu0 0
    %196 = vmatprep.subr.bf16.mxu0 0
    %197 = vmatpush1.bf16.msra.mxu0 0
    %198 = vmatprep.subr.bf16.mxu0 0
    %199 = vmatpush1.bf16.msra.mxu0 0
    %200 = vmatprep.subr.bf16.mxu0 0
    %201 = vmatpush1.bf16.msra.mxu0 0
    %202 = vmatprep.subr.bf16.mxu0 0
    %203 = vmatpush1.bf16.msra.mxu0 0
    %204 = vmatprep.subr.bf16.mxu0 0
    %205 = vmatpush1.bf16.msra.mxu0 0
    %206 = vmatprep.mubr.bf16.mxu0 0
    %207 = vmatmul.mubr.bf16.gmra.mrb[0].mxu0 %v169
    %v208 = vpop.f32.mrb[0].mxu0
    %v209 = vadd.f32 0.0, %v208
    %v210 = vpop.f32.mrb[0].mxu0
    %v211 = vpop.f32.mrb[0].mxu0
    %v212 = vadd.f32 0.0, %v211
    %v213 = vpop.f32.mrb[0].mxu0
    %214 = vmatprep.mubr.bf16.mxu0 0
    %215 = vmatmul.mubr.bf16.gmra.mrb[0].mxu0 %v172
    %v216 = vpop.f32.mrb[0].mxu0
    %v217 = vadd.f32 0.0, %v216
    %v218 = vpop.f32.mrb[0].mxu0
    %v219 = vpop.f32.mrb[0].mxu0
    %v220 = vadd.f32 0.0, %v219
    %v221 = vpop.f32.mrb[0].mxu0
    %222 = vdwg.mxu0
    %v223 = vpack.c.bf16 %v212, %v209
    %v224 = vpack.c.bf16 %v220, %v217
    %v225 = vld [vmem:[%s3] sm:$0xf]
    %v226 = vld [vmem:[%s3 + $0x4] sm:$0xf]
    %v227 = vld [vmem:[%s3 + $0x8] sm:$0xf]
    %v228 = vld [vmem:[%s3 + $0xc] sm:$0xf]
    %v229 = vld [vmem:[%s3 + $0x10] sm:$0xf]
    %v230 = vld [vmem:[%s3 + $0x14] sm:$0xf]
    %v231 = vld [vmem:[%s3 + $0x18] sm:$0xf]
    %v232 = vld [vmem:[%s3 + $0x1c] sm:$0xf]
    %s233 = scalar_lea.vmem %s3, 32
    %v234 = vld [vmem:[%s233] sm:$0xf]
    %v235 = vld [vmem:[%s233 + $0x4] sm:$0xf]
    %v236 = vld [vmem:[%s233 + $0x8] sm:$0xf]
    %v237 = vld [vmem:[%s233 + $0xc] sm:$0xf]
    %v238 = vld [vmem:[%s233 + $0x10] sm:$0xf]
    %v239 = vld [vmem:[%s233 + $0x14] sm:$0xf]
    %v240 = vld [vmem:[%s233 + $0x18] sm:$0xf]
    %v241 = vld [vmem:[%s233 + $0x1c] sm:$0xf]
    %v250 = vunpack.c.l.b16 %v234
    %v251 = vunpack.c.l.b16 %v235
    %v252 = vunpack.c.l.b16 %v236
    %v253 = vunpack.c.l.b16 %v237
    %v254 = vunpack.c.l.b16 %v238
    %v255 = vunpack.c.l.b16 %v239
    %v256 = vunpack.c.l.b16 %v240
    %v257 = vunpack.c.l.b16 %v241
    %v258 = vpack.c.b16 %v251, %v250
    %v259 = vpack.c.b16 %v253, %v252
    %v260 = vpack.c.b16 %v255, %v254
    %v261 = vpack.c.b16 %v257, %v256
    %vm266 = vcmask 523264
    %v268 = vsel %vm266, %v88, 0
    %v271 = vsel %vm266, %v89, 0
    %273 = vmatprep.subr.bf16.mxu0 0
    %274 = vmatpush1.bf16.msra.mxu0 %v258
    %275 = vmatprep.subr.bf16.mxu0 0
    %276 = vmatpush1.bf16.msra.mxu0 %v259
    %277 = vmatprep.subr.bf16.mxu0 0
    %278 = vmatpush1.bf16.msra.mxu0 %v260
    %279 = vmatprep.subr.bf16.mxu0 0
    %280 = vmatpush1.bf16.msra.mxu0 %v261
    %281 = vmatprep.subr.bf16.mxu0 0
    %282 = vmatpush1.bf16.msra.mxu0 0
    %283 = vmatprep.subr.bf16.mxu0 0
    %284 = vmatpush1.bf16.msra.mxu0 0
    %285 = vmatprep.subr.bf16.mxu0 0
    %286 = vmatpush1.bf16.msra.mxu0 0
    %287 = vmatprep.subr.bf16.mxu0 0
    %288 = vmatpush1.bf16.msra.mxu0 0
    %289 = vmatprep.subr.bf16.mxu0 0
    %290 = vmatpush1.bf16.msra.mxu0 0
    %291 = vmatprep.subr.bf16.mxu0 0
    %292 = vmatpush1.bf16.msra.mxu0 0
    %293 = vmatprep.subr.bf16.mxu0 0
    %294 = vmatpush1.bf16.msra.mxu0 0
    %295 = vmatprep.subr.bf16.mxu0 0
    %296 = vmatpush1.bf16.msra.mxu0 0
    %297 = vmatprep.subr.bf16.mxu0 0
    %298 = vmatpush1.bf16.msra.mxu0 0
    %299 = vmatprep.subr.bf16.mxu0 0
    %300 = vmatpush1.bf16.msra.mxu0 0
    %301 = vmatprep.subr.bf16.mxu0 0
    %302 = vmatpush1.bf16.msra.mxu0 0
    %303 = vmatprep.subr.bf16.mxu0 0
    %304 = vmatpush1.bf16.msra.mxu0 0
    %305 = vmatprep.mubr.bf16.mxu0 0
    %306 = vmatmul.mubr.bf16.gmra.mrb[0].mxu0 %v268
    %v307 = vpop.f32.mrb[0].mxu0
    %v308 = vadd.f32 0.0, %v307
    %v309 = vpop.f32.mrb[0].mxu0
    %v310 = vpop.f32.mrb[0].mxu0
    %v311 = vadd.f32 0.0, %v310
    %v312 = vpop.f32.mrb[0].mxu0
    %313 = vmatprep.mubr.bf16.mxu0 0
    %314 = vmatmul.mubr.bf16.gmra.mrb[0].mxu0 %v271
    %v315 = vpop.f32.mrb[0].mxu0
    %v316 = vadd.f32 0.0, %v315
    %v317 = vpop.f32.mrb[0].mxu0
    %v318 = vpop.f32.mrb[0].mxu0
    %v319 = vadd.f32 0.0, %v318
    %v320 = vpop.f32.mrb[0].mxu0
    %321 = vdwg.mxu0
    %v330 = vunpack.c.l.b16 %v225
    %v331 = vunpack.c.l.b16 %v226
    %v332 = vunpack.c.l.b16 %v227
    %v333 = vunpack.c.l.b16 %v228
    %v334 = vunpack.c.l.b16 %v229
    %v335 = vunpack.c.l.b16 %v230
    %v336 = vunpack.c.l.b16 %v231
    %v337 = vunpack.c.l.b16 %v232
    %v338 = vpack.c.b16 %v331, %v330
    %v339 = vpack.c.b16 %v333, %v332
    %v340 = vpack.c.b16 %v335, %v334
    %v341 = vpack.c.b16 %v337, %v336
    %v347 = vsel %vm266, %v156, 0
    %v350 = vsel %vm266, %v157, 0
    %352 = vmatprep.subr.bf16.mxu0 0
    %353 = vmatpush1.bf16.msra.mxu0 %v338
    %354 = vmatprep.subr.bf16.mxu0 0
    %355 = vmatpush1.bf16.msra.mxu0 %v339
    %356 = vmatprep.subr.bf16.mxu0 0
    %357 = vmatpush1.bf16.msra.mxu0 %v340
    %358 = vmatprep.subr.bf16.mxu0 0
    %359 = vmatpush1.bf16.msra.mxu0 %v341
    %360 = vmatprep.subr.bf16.mxu0 0
    %361 = vmatpush1.bf16.msra.mxu0 0
    %362 = vmatprep.subr.bf16.mxu0 0
    %363 = vmatpush1.bf16.msra.mxu0 0
    %364 = vmatprep.subr.bf16.mxu0 0
    %365 = vmatpush1.bf16.msra.mxu0 0
    %366 = vmatprep.subr.bf16.mxu0 0
    %367 = vmatpush1.bf16.msra.mxu0 0
    %368 = vmatprep.subr.bf16.mxu0 0
    %369 = vmatpush1.bf16.msra.mxu0 0
    %370 = vmatprep.subr.bf16.mxu0 0
    %371 = vmatpush1.bf16.msra.mxu0 0
    %372 = vmatprep.subr.bf16.mxu0 0
    %373 = vmatpush1.bf16.msra.mxu0 0
    %374 = vmatprep.subr.bf16.mxu0 0
    %375 = vmatpush1.bf16.msra.mxu0 0
    %376 = vmatprep.subr.bf16.mxu0 0
    %377 = vmatpush1.bf16.msra.mxu0 0
    %378 = vmatprep.subr.bf16.mxu0 0
    %379 = vmatpush1.bf16.msra.mxu0 0
    %380 = vmatprep.subr.bf16.mxu0 0
    %381 = vmatpush1.bf16.msra.mxu0 0
    %382 = vmatprep.subr.bf16.mxu0 0
    %383 = vmatpush1.bf16.msra.mxu0 0
    %384 = vmatprep.mubr.bf16.mxu0 0
    %385 = vmatmul.mubr.bf16.gmra.mrb[0].mxu0 %v347
    %v386 = vpop.f32.mrb[0].mxu0
    %v387 = vadd.f32 %v308, %v386
    %v388 = vpop.f32.mrb[0].mxu0
    %v389 = vpop.f32.mrb[0].mxu0
    %v390 = vadd.f32 %v311, %v389
    %v391 = vpop.f32.mrb[0].mxu0
    %392 = vmatprep.mubr.bf16.mxu0 0
    %393 = vmatmul.mubr.bf16.gmra.mrb[0].mxu0 %v350
    %v394 = vpop.f32.mrb[0].mxu0
    %v395 = vadd.f32 %v316, %v394
    %v396 = vpop.f32.mrb[0].mxu0
    %v397 = vpop.f32.mrb[0].mxu0
    %v398 = vadd.f32 %v319, %v397
    %v399 = vpop.f32.mrb[0].mxu0
    %400 = vdwg.mxu0
    %s401 = scalar_lea.vmem %s3, 64
    %v402 = vld [vmem:[%s401] sm:$0xf]
    %v403 = vld [vmem:[%s401 + $0x4] sm:$0xf]
    %v404 = vld [vmem:[%s401 + $0x8] sm:$0xf]
    %v405 = vld [vmem:[%s401 + $0xc] sm:$0xf]
    %v406 = vld [vmem:[%s401 + $0x10] sm:$0xf]
    %v407 = vld [vmem:[%s401 + $0x14] sm:$0xf]
    %v408 = vld [vmem:[%s401 + $0x18] sm:$0xf]
    %v409 = vld [vmem:[%s401 + $0x1c] sm:$0xf]
    %v418 = vunpack.c.l.b16 %v402
    %v419 = vunpack.c.l.b16 %v403
    %v420 = vunpack.c.l.b16 %v404
    %v421 = vunpack.c.l.b16 %v405
    %v422 = vunpack.c.l.b16 %v406
    %v423 = vunpack.c.l.b16 %v407
    %v424 = vunpack.c.l.b16 %v408
    %v425 = vunpack.c.l.b16 %v409
    %v426 = vpack.c.b16 %v419, %v418
    %v427 = vpack.c.b16 %v421, %v420
    %v428 = vpack.c.b16 %v423, %v422
    %v429 = vpack.c.b16 %v425, %v424
    %v435 = vsel %vm266, %v223, 0
    %v438 = vsel %vm266, %v224, 0
    %440 = vmatprep.subr.bf16.mxu0 0
    %441 = vmatpush1.bf16.msra.mxu0 %v426
    %442 = vmatprep.subr.bf16.mxu0 0
    %443 = vmatpush1.bf16.msra.mxu0 %v427
    %444 = vmatprep.subr.bf16.mxu0 0
    %445 = vmatpush1.bf16.msra.mxu0 %v428
    %446 = vmatprep.subr.bf16.mxu0 0
    %447 = vmatpush1.bf16.msra.mxu0 %v429
    %448 = vmatprep.subr.bf16.mxu0 0
    %449 = vmatpush1.bf16.msra.mxu0 0
    %450 = vmatprep.subr.bf16.mxu0 0
    %451 = vmatpush1.bf16.msra.mxu0 0
    %452 = vmatprep.subr.bf16.mxu0 0
    %453 = vmatpush1.bf16.msra.mxu0 0
    %454 = vmatprep.subr.bf16.mxu0 0
    %455 = vmatpush1.bf16.msra.mxu0 0
    %456 = vmatprep.subr.bf16.mxu0 0
    %457 = vmatpush1.bf16.msra.mxu0 0
    %458 = vmatprep.subr.bf16.mxu0 0
    %459 = vmatpush1.bf16.msra.mxu0 0
    %460 = vmatprep.subr.bf16.mxu0 0
    %461 = vmatpush1.bf16.msra.mxu0 0
    %462 = vmatprep.subr.bf16.mxu0 0
    %463 = vmatpush1.bf16.msra.mxu0 0
    %464 = vmatprep.subr.bf16.mxu0 0
    %465 = vmatpush1.bf16.msra.mxu0 0
    %466 = vmatprep.subr.bf16.mxu0 0
    %467 = vmatpush1.bf16.msra.mxu0 0
    %468 = vmatprep.subr.bf16.mxu0 0
    %469 = vmatpush1.bf16.msra.mxu0 0
    %470 = vmatprep.subr.bf16.mxu0 0
    %471 = vmatpush1.bf16.msra.mxu0 0
    %472 = vmatprep.mubr.bf16.mxu0 0
    %473 = vmatmul.mubr.bf16.gmra.mrb[0].mxu0 %v435
    %v474 = vpop.f32.mrb[0].mxu0
    %v475 = vadd.f32 0.0, %v474
    %v476 = vpop.f32.mrb[0].mxu0
    %v477 = vpop.f32.mrb[0].mxu0
    %v478 = vadd.f32 0.0, %v477
    %v479 = vpop.f32.mrb[0].mxu0
    %480 = vmatprep.mubr.bf16.mxu0 0
    %481 = vmatmul.mubr.bf16.gmra.mrb[0].mxu0 %v438
    %v482 = vpop.f32.mrb[0].mxu0
    %v483 = vadd.f32 0.0, %v482
    %v484 = vpop.f32.mrb[0].mxu0
    %v485 = vpop.f32.mrb[0].mxu0
    %v486 = vadd.f32 0.0, %v485
    %v487 = vpop.f32.mrb[0].mxu0
    %488 = vdwg.mxu0
    %v489 = vadd.f32 %v387, %v475
    %v490 = vadd.f32 %v390, %v478
    %v491 = vadd.f32 %v395, %v483
    %v492 = vadd.f32 %v398, %v486
    %v493 = vld [vmem:[#allocation4] sm:$0xff]
    %v494 = vld [vmem:[#allocation4 + $0x8] sm:$0xff]
    %v495 = vld [vmem:[#allocation4 + $0x10] sm:$0xff]
    %v496 = vld [vmem:[#allocation4 + $0x18] sm:$0xff]
    %v497 = vld [vmem:[#allocation4 + $0x20] sm:$0xff]
    %v498 = vld [vmem:[#allocation4 + $0x28] sm:$0xff]
    %v499 = vld [vmem:[#allocation4 + $0x30] sm:$0xff]
    %v500 = vld [vmem:[#allocation4 + $0x38] sm:$0xff]
    %v501 = vsel %vm266, %v489, 0.0
    %v502 = vsel %vm266, %v490, 0.0
    %v503 = vadd.f32 %v501, %v502
    %v504 = vsel %vm266, %v491, 0.0
    %v505 = vadd.f32 %v503, %v504
    %v506 = vsel %vm266, %v492, 0.0
    %v507 = vadd.f32 %v505, %v506
    %v508 = vrot.slane %v507, 4
    %v509 = vadd.f32 %v507, %v508
    %v510 = vrot.slane %v509, 2
    %v511 = vadd.f32 %v509, %v510
    %v512 = vrot.slane %v511, 1
    %v513 = vadd.f32 %v511, %v512
    %v515 = vsel %vm266, %v513, 0
    %517 = vmatprep.subr.mxu0 0.0
    %518 = vmatpush1.msra.mxu0 %v493
    %519 = vmatprep.subr.mxu0 0.0
    %520 = vmatpush1.msra.mxu0 %v494
    %521 = vmatprep.subr.mxu0 0.0
    %522 = vmatpush1.msra.mxu0 %v495
    %523 = vmatprep.subr.mxu0 0.0
    %524 = vmatpush1.msra.mxu0 %v496
    %525 = vmatprep.subr.mxu0 0.0
    %526 = vmatpush1.msra.mxu0 %v497
    %527 = vmatprep.subr.mxu0 0.0
    %528 = vmatpush1.msra.mxu0 %v498
    %529 = vmatprep.subr.mxu0 0.0
    %530 = vmatpush1.msra.mxu0 %v499
    %531 = vmatprep.subr.mxu0 0.0
    %532 = vmatpush1.msra.mxu0 %v500
    %533 = vmatprep.subr.mxu0 0.0
    %534 = vmatpush1.msra.mxu0 0.0
    %535 = vmatprep.subr.mxu0 0.0
    %536 = vmatpush1.msra.mxu0 0.0
    %537 = vmatprep.subr.mxu0 0.0
    %538 = vmatpush1.msra.mxu0 0.0
    %539 = vmatprep.subr.mxu0 0.0
    %540 = vmatpush1.msra.mxu0 0.0
    %541 = vmatprep.subr.mxu0 0.0
    %542 = vmatpush1.msra.mxu0 0.0
    %543 = vmatprep.subr.mxu0 0.0
    %544 = vmatpush1.msra.mxu0 0.0
    %545 = vmatprep.subr.mxu0 0.0
    %546 = vmatpush1.msra.mxu0 0.0
    %547 = vmatprep.subr.mxu0 0.0
    %548 = vmatpush1.msra.mxu0 0.0
    %549 = vmatprep.subr.mxu0 0.0
    %550 = vmatpush1.msra.mxu0 0.0
    %551 = vmatprep.subr.mxu0 0.0
    %552 = vmatpush1.msra.mxu0 0.0
    %553 = vmatprep.subr.mxu0 0.0
    %554 = vmatpush1.msra.mxu0 0.0
    %555 = vmatprep.subr.mxu0 0.0
    %556 = vmatpush1.msra.mxu0 0.0
    %557 = vmatprep.subr.mxu0 0.0
    %558 = vmatpush1.msra.mxu0 0.0
    %559 = vmatprep.subr.mxu0 0.0
    %560 = vmatpush1.msra.mxu0 0.0
    %561 = vmatprep.subr.mxu0 0.0
    %562 = vmatpush1.msra.mxu0 0.0
    %563 = vmatprep.subr.mxu0 0.0
    %564 = vmatpush1.msra.mxu0 0.0
    %565 = vmatprep.subr.mxu0 0.0
    %566 = vmatpush1.msra.mxu0 0.0
    %567 = vmatprep.subr.mxu0 0.0
    %568 = vmatpush1.msra.mxu0 0.0
    %569 = vmatprep.subr.mxu0 0.0
    %570 = vmatpush1.msra.mxu0 0.0
    %571 = vmatprep.subr.mxu0 0.0
    %572 = vmatpush1.msra.mxu0 0.0
    %573 = vmatprep.subr.mxu0 0.0
    %574 = vmatpush1.msra.mxu0 0.0
    %575 = vmatprep.subr.mxu0 0.0
    %576 = vmatpush1.msra.mxu0 0.0
    %577 = vmatprep.subr.mxu0 0.0
    %578 = vmatpush1.msra.mxu0 0.0
    %579 = vmatprep.subr.mxu0 0.0
    %580 = vmatpush1.msra.mxu0 0.0
    %581 = vmatprep.mubr.f32.mxu0 0.0
    %582 = vmatmul.mubr.f32.gmra.mrb[0].mxu0 %v515
    %v583 = vpop.f32.mrb[0].mxu0
    %v584 = vadd.f32 0.0, %v583
    %v585 = vpop.f32.mrb[0].mxu0
    %586 = vdwg.mxu0
    %v587 = vmul.f32 %v584, 0.001953125
    %v588 = vlaneseq
    %v589 = vshrl.u32 %v588, 7
    %v590 = vsub.s32 0, %v589
    %v591 = vrot.slane %v587, %v590
    %v592 = vsub.f32 %v489, %v591
    %v593 = vsub.f32 %v490, %v591
    %v594 = vsub.f32 %v491, %v591
    %v595 = vsub.f32 %v492, %v591
    %v596 = vmul.f32 %v592, %v592
    %v597 = vmul.f32 %v593, %v593
    %v598 = vmul.f32 %v594, %v594
    %v599 = vmul.f32 %v595, %v595
    %v600 = vsel %vm266, %v596, 0.0
    %v601 = vsel %vm266, %v597, 0.0
    %v602 = vadd.f32 %v600, %v601
    %v603 = vsel %vm266, %v598, 0.0
    %v604 = vadd.f32 %v602, %v603
    %v605 = vsel %vm266, %v599, 0.0
    %v606 = vadd.f32 %v604, %v605
    %v607 = vrot.slane %v606, 4
    %v608 = vadd.f32 %v606, %v607
    %v609 = vrot.slane %v608, 2
    %v610 = vadd.f32 %v608, %v609
    %v611 = vrot.slane %v610, 1
    %v612 = vadd.f32 %v610, %v611
    %v614 = vsel %vm266, %v612, 0
    %616 = vmatprep.subr.mxu0 0.0
    %617 = vmatpush1.msra.mxu0 %v493
    %618 = vmatprep.subr.mxu0 0.0
    %619 = vmatpush1.msra.mxu0 %v494
    %620 = vmatprep.subr.mxu0 0.0
    %621 = vmatpush1.msra.mxu0 %v495
    %622 = vmatprep.subr.mxu0 0.0
    %623 = vmatpush1.msra.mxu0 %v496
    %624 = vmatprep.subr.mxu0 0.0
    %625 = vmatpush1.msra.mxu0 %v497
    %626 = vmatprep.subr.mxu0 0.0
    %627 = vmatpush1.msra.mxu0 %v498
    %628 = vmatprep.subr.mxu0 0.0
    %629 = vmatpush1.msra.mxu0 %v499
    %630 = vmatprep.subr.mxu0 0.0
    %631 = vmatpush1.msra.mxu0 %v500
    %632 = vmatprep.subr.mxu0 0.0
    %633 = vmatpush1.msra.mxu0 0.0
    %634 = vmatprep.subr.mxu0 0.0
    %635 = vmatpush1.msra.mxu0 0.0
    %636 = vmatprep.subr.mxu0 0.0
    %637 = vmatpush1.msra.mxu0 0.0
    %638 = vmatprep.subr.mxu0 0.0
    %639 = vmatpush1.msra.mxu0 0.0
    %640 = vmatprep.subr.mxu0 0.0
    %641 = vmatpush1.msra.mxu0 0.0
    %642 = vmatprep.subr.mxu0 0.0
    %643 = vmatpush1.msra.mxu0 0.0
    %644 = vmatprep.subr.mxu0 0.0
    %645 = vmatpush1.msra.mxu0 0.0
    %646 = vmatprep.subr.mxu0 0.0
    %647 = vmatpush1.msra.mxu0 0.0
    %648 = vmatprep.subr.mxu0 0.0
    %649 = vmatpush1.msra.mxu0 0.0
    %650 = vmatprep.subr.mxu0 0.0
    %651 = vmatpush1.msra.mxu0 0.0
    %652 = vmatprep.subr.mxu0 0.0
    %653 = vmatpush1.msra.mxu0 0.0
    %654 = vmatprep.subr.mxu0 0.0
    %655 = vmatpush1.msra.mxu0 0.0
    %656 = vmatprep.subr.mxu0 0.0
    %657 = vmatpush1.msra.mxu0 0.0
    %658 = vmatprep.subr.mxu0 0.0
    %659 = vmatpush1.msra.mxu0 0.0
    %660 = vmatprep.subr.mxu0 0.0
    %661 = vmatpush1.msra.mxu0 0.0
    %662 = vmatprep.subr.mxu0 0.0
    %663 = vmatpush1.msra.mxu0 0.0
    %664 = vmatprep.subr.mxu0 0.0
    %665 = vmatpush1.msra.mxu0 0.0
    %666 = vmatprep.subr.mxu0 0.0
    %667 = vmatpush1.msra.mxu0 0.0
    %668 = vmatprep.subr.mxu0 0.0
    %669 = vmatpush1.msra.mxu0 0.0
    %670 = vmatprep.subr.mxu0 0.0
    %671 = vmatpush1.msra.mxu0 0.0
    %672 = vmatprep.subr.mxu0 0.0
    %673 = vmatpush1.msra.mxu0 0.0
    %674 = vmatprep.subr.mxu0 0.0
    %675 = vmatpush1.msra.mxu0 0.0
    %676 = vmatprep.subr.mxu0 0.0
    %677 = vmatpush1.msra.mxu0 0.0
    %678 = vmatprep.subr.mxu0 0.0
    %679 = vmatpush1.msra.mxu0 0.0
    %680 = vmatprep.mubr.f32.mxu0 0.0
    %681 = vmatmul.mubr.f32.gmra.mrb[0].mxu0 %v614
    %v682 = vpop.f32.mrb[0].mxu0
    %v683 = vadd.f32 0.0, %v682
    %v684 = vpop.f32.mrb[0].mxu0
    %685 = vdwg.mxu0
    %v686 = vmul.f32 %v683, 0.001953125
    %v687 = vld [vmem:[%s8] sm:$0x1]
    %v688 = vadd.f32 %v686, 1e-05
    %v689 = vrsqrt.pop %v688
    %v690 = vmul.f32 %v687, %v689
    %v692 = vlaneseq
    %v693 = vshrl.u32 %v692, 7
    %v694 = vsub.s32 0, %v693
    %v695 = vrot.slane %v690, %v694
    %v697 = vmul.f32 %v592, %v695
    %v698 = vmul.f32 %v593, %v695
    %v699 = vmul.f32 %v594, %v695
    %v700 = vmul.f32 %v595, %v695
    %v701 = vld [vmem:[%s9] sm:$0x1]
    %v703 = vlaneseq
    %v704 = vshrl.u32 %v703, 7
    %v705 = vsub.s32 0, %v704
    %v706 = vrot.slane %v701, %v705
    %v708 = vadd.f32 %v697, %v706
    %v709 = vadd.f32 %v698, %v706
    %v710 = vadd.f32 %v699, %v706
    %v711 = vadd.f32 %v700, %v706
    %v712 = vmax.f32 %v708, 0.0
    %v713 = vmax.f32 %v709, 0.0
    %v714 = vmax.f32 %v710, 0.0
    %v715 = vmax.f32 %v711, 0.0
    %v716 = vpack.c.bf16 %v713, %v712
    %v717 = vpack.c.bf16 %v715, %v714
    %718 = vmatprep.subr.bf16.mxu0 0
    %719 = vmatpush1.bf16.msra.mxu0 %v716
    %720 = vmatprep.subr.bf16.mxu0 0
    %721 = vmatpush1.bf16.msra.mxu0 %v717
    %722 = vmatprep.subr.bf16.mxu0 0
    %723 = vmatpush1.bf16.msra.mxu0 0
    %724 = vmatprep.subr.bf16.mxu0 0
    %725 = vmatpush1.bf16.msra.mxu0 0
    %726 = vmatprep.subr.bf16.mxu0 0
    %727 = vmatpush1.bf16.msra.mxu0 0
    %728 = vmatprep.subr.bf16.mxu0 0
    %729 = vmatpush1.bf16.msra.mxu0 0
    %730 = vmatprep.subr.bf16.mxu0 0
    %731 = vmatpush1.bf16.msra.mxu0 0
    %732 = vmatprep.subr.bf16.mxu0 0
    %733 = vmatpush1.bf16.msra.mxu0 0
    %734 = vmatprep.subr.bf16.mxu0 0
    %735 = vmatpush1.bf16.msra.mxu0 0
    %736 = vmatprep.subr.bf16.mxu0 0
    %737 = vmatpush1.bf16.msra.mxu0 0
    %738 = vmatprep.subr.bf16.mxu0 0
    %739 = vmatpush1.bf16.msra.mxu0 0
    %740 = vmatprep.subr.bf16.mxu0 0
    %741 = vmatpush1.bf16.msra.mxu0 0
    %742 = vmatprep.subr.bf16.mxu0 0
    %743 = vmatpush1.bf16.msra.mxu0 0
    %744 = vmatprep.subr.bf16.mxu0 0
    %745 = vmatpush1.bf16.msra.mxu0 0
    %746 = vmatprep.subr.bf16.mxu0 0
    %747 = vmatpush1.bf16.msra.mxu0 0
    %748 = vmatprep.subr.bf16.mxu0 0
    %749 = vmatpush1.bf16.msra.mxu0 0
    %750 = vmatprep.mubr.bf16.mxu0 0
    %751 = vmatmul.mubr.bf16.gmra.mrb[0].mxu0 %v102
    %v752 = vpop.f32.mrb[0].mxu0
    %v753 = vadd.f32 0.0, %v752
    %v754 = vpop.f32.mrb[0].mxu0
    %v755 = vpop.f32.mrb[0].mxu0
    %v756 = vadd.f32 0.0, %v755
    %v757 = vpop.f32.mrb[0].mxu0
    %758 = vmatprep.mubr.bf16.mxu0 0
    %759 = vmatmul.mubr.bf16.gmra.mrb[0].mxu0 %v105
    %v760 = vpop.f32.mrb[0].mxu0
    %v761 = vadd.f32 0.0, %v760
    %v762 = vpop.f32.mrb[0].mxu0
    %v763 = vpop.f32.mrb[0].mxu0
    %v764 = vadd.f32 0.0, %v763
    %v765 = vpop.f32.mrb[0].mxu0
    %766 = vdwg.mxu0
    %v767 = vpack.c.bf16 %v756, %v753
    %v768 = vpack.c.bf16 %v764, %v761
    %769 = vmatprep.subr.bf16.mxu0 0
    %770 = vmatpush1.bf16.msra.mxu0 %v716
    %771 = vmatprep.subr.bf16.mxu0 0
    %772 = vmatpush1.bf16.msra.mxu0 %v717
    %773 = vmatprep.subr.bf16.mxu0 0
    %774 = vmatpush1.bf16.msra.mxu0 0
    %775 = vmatprep.subr.bf16.mxu0 0
    %776 = vmatpush1.bf16.msra.mxu0 0
    %777 = vmatprep.subr.bf16.mxu0 0
    %778 = vmatpush1.bf16.msra.mxu0 0
    %779 = vmatprep.subr.bf16.mxu0 0
    %780 = vmatpush1.bf16.msra.mxu0 0
    %781 = vmatprep.subr.bf16.mxu0 0
    %782 = vmatpush1.bf16.msra.mxu0 0
    %783 = vmatprep.subr.bf16.mxu0 0
    %784 = vmatpush1.bf16.msra.mxu0 0
    %785 = vmatprep.subr.bf16.mxu0 0
    %786 = vmatpush1.bf16.msra.mxu0 0
    %787 = vmatprep.subr.bf16.mxu0 0
    %788 = vmatpush1.bf16.msra.mxu0 0
    %789 = vmatprep.subr.bf16.mxu0 0
    %790 = vmatpush1.bf16.msra.mxu0 0
    %791 = vmatprep.subr.bf16.mxu0 0
    %792 = vmatpush1.bf16.msra.mxu0 0
    %793 = vmatprep.subr.bf16.mxu0 0
    %794 = vmatpush1.bf16.msra.mxu0 0
    %795 = vmatprep.subr.bf16.mxu0 0
    %796 = vmatpush1.bf16.msra.mxu0 0
    %797 = vmatprep.subr.bf16.mxu0 0
    %798 = vmatpush1.bf16.msra.mxu0 0
    %799 = vmatprep.subr.bf16.mxu0 0
    %800 = vmatpush1.bf16.msra.mxu0 0
    %801 = vmatprep.mubr.bf16.mxu0 0
    %802 = vmatmul.mubr.bf16.gmra.mrb[0].mxu0 %v169
    %v803 = vpop.f32.mrb[0].mxu0
    %v804 = vadd.f32 0.0, %v803
    %v805 = vpop.f32.mrb[0].mxu0
    %v806 = vpop.f32.mrb[0].mxu0
    %v807 = vadd.f32 0.0, %v806
    %v808 = vpop.f32.mrb[0].mxu0
    %809 = vmatprep.mubr.bf16.mxu0 0
    %810 = vmatmul.mubr.bf16.gmra.mrb[0].mxu0 %v172
    %v811 = vpop.f32.mrb[0].mxu0
    %v812 = vadd.f32 0.0, %v811
    %v813 = vpop.f32.mrb[0].mxu0
    %v814 = vpop.f32.mrb[0].mxu0
    %v815 = vadd.f32 0.0, %v814
    %v816 = vpop.f32.mrb[0].mxu0
    %817 = vdwg.mxu0
    %v818 = vpack.c.bf16 %v807, %v804
    %v819 = vpack.c.bf16 %v815, %v812
    %v820 = vld [vmem:[#allocation2] sm:$0xf]
    %v821 = vld [vmem:[#allocation2 + $0x4] sm:$0xf]
    %v822 = vld [vmem:[#allocation2 + $0x8] sm:$0xf]
    %v823 = vld [vmem:[#allocation2 + $0xc] sm:$0xf]
    %v824 = vld [vmem:[#allocation2 + $0x10] sm:$0xf]
    %v825 = vld [vmem:[#allocation2 + $0x14] sm:$0xf]
    %v826 = vld [vmem:[#allocation2 + $0x18] sm:$0xf]
    %v827 = vld [vmem:[#allocation2 + $0x1c] sm:$0xf]
    %s828 = scalar_lea.vmem [#allocation2], 32
    %v829 = vld [vmem:[%s828] sm:$0xf]
    %v830 = vld [vmem:[%s828 + $0x4] sm:$0xf]
    %v831 = vld [vmem:[%s828 + $0x8] sm:$0xf]
    %v832 = vld [vmem:[%s828 + $0xc] sm:$0xf]
    %v833 = vld [vmem:[%s828 + $0x10] sm:$0xf]
    %v834 = vld [vmem:[%s828 + $0x14] sm:$0xf]
    %v835 = vld [vmem:[%s828 + $0x18] sm:$0xf]
    %v836 = vld [vmem:[%s828 + $0x1c] sm:$0xf]
    %v845 = vunpack.c.l.b16 %v829
    %v846 = vunpack.c.l.b16 %v830
    %v847 = vunpack.c.l.b16 %v831
    %v848 = vunpack.c.l.b16 %v832
    %v849 = vunpack.c.l.b16 %v833
    %v850 = vunpack.c.l.b16 %v834
    %v851 = vunpack.c.l.b16 %v835
    %v852 = vunpack.c.l.b16 %v836
    %v853 = vpack.c.b16 %v846, %v845
    %v854 = vpack.c.b16 %v848, %v847
    %v855 = vpack.c.b16 %v850, %v849
    %v856 = vpack.c.b16 %v852, %v851
    %v862 = vsel %vm266, %v716, 0
    %v865 = vsel %vm266, %v717, 0
    %867 = vmatprep.subr.bf16.mxu0 0
    %868 = vmatpush1.bf16.msra.mxu0 %v853
    %869 = vmatprep.subr.bf16.mxu0 0
    %870 = vmatpush1.bf16.msra.mxu0 %v854
    %871 = vmatprep.subr.bf16.mxu0 0
    %872 = vmatpush1.bf16.msra.mxu0 %v855
    %873 = vmatprep.subr.bf16.mxu0 0
    %874 = vmatpush1.bf16.msra.mxu0 %v856
    %875 = vmatprep.subr.bf16.mxu0 0
    %876 = vmatpush1.bf16.msra.mxu0 0
    %877 = vmatprep.subr.bf16.mxu0 0
    %878 = vmatpush1.bf16.msra.mxu0 0
    %879 = vmatprep.subr.bf16.mxu0 0
    %880 = vmatpush1.bf16.msra.mxu0 0
    %881 = vmatprep.subr.bf16.mxu0 0
    %882 = vmatpush1.bf16.msra.mxu0 0
    %883 = vmatprep.subr.bf16.mxu0 0
    %884 = vmatpush1.bf16.msra.mxu0 0
    %885 = vmatprep.subr.bf16.mxu0 0
    %886 = vmatpush1.bf16.msra.mxu0 0
    %887 = vmatprep.subr.bf16.mxu0 0
    %888 = vmatpush1.bf16.msra.mxu0 0
    %889 = vmatprep.subr.bf16.mxu0 0
    %890 = vmatpush1.bf16.msra.mxu0 0
    %891 = vmatprep.subr.bf16.mxu0 0
    %892 = vmatpush1.bf16.msra.mxu0 0
    %893 = vmatprep.subr.bf16.mxu0 0
    %894 = vmatpush1.bf16.msra.mxu0 0
    %895 = vmatprep.subr.bf16.mxu0 0
    %896 = vmatpush1.bf16.msra.mxu0 0
    %897 = vmatprep.subr.bf16.mxu0 0
    %898 = vmatpush1.bf16.msra.mxu0 0
    %899 = vmatprep.mubr.bf16.mxu0 0
    %900 = vmatmul.mubr.bf16.gmra.mrb[0].mxu0 %v862
    %v901 = vpop.f32.mrb[0].mxu0
    %v902 = vadd.f32 0.0, %v901
    %v903 = vpop.f32.mrb[0].mxu0
    %v904 = vpop.f32.mrb[0].mxu0
    %v905 = vadd.f32 0.0, %v904
    %v906 = vpop.f32.mrb[0].mxu0
    %907 = vmatprep.mubr.bf16.mxu0 0
    %908 = vmatmul.mubr.bf16.gmra.mrb[0].mxu0 %v865
    %v909 = vpop.f32.mrb[0].mxu0
    %v910 = vadd.f32 0.0, %v909
    %v911 = vpop.f32.mrb[0].mxu0
    %v912 = vpop.f32.mrb[0].mxu0
    %v913 = vadd.f32 0.0, %v912
    %v914 = vpop.f32.mrb[0].mxu0
    %915 = vdwg.mxu0
    %v924 = vunpack.c.l.b16 %v820
    %v925 = vunpack.c.l.b16 %v821
    %v926 = vunpack.c.l.b16 %v822
    %v927 = vunpack.c.l.b16 %v823
    %v928 = vunpack.c.l.b16 %v824
    %v929 = vunpack.c.l.b16 %v825
    %v930 = vunpack.c.l.b16 %v826
    %v931 = vunpack.c.l.b16 %v827
    %v932 = vpack.c.b16 %v925, %v924
    %v933 = vpack.c.b16 %v927, %v926
    %v934 = vpack.c.b16 %v929, %v928
    %v935 = vpack.c.b16 %v931, %v930
    %v941 = vsel %vm266, %v767, 0
    %v944 = vsel %vm266, %v768, 0
    %946 = vmatprep.subr.bf16.mxu0 0
    %947 = vmatpush1.bf16.msra.mxu0 %v932
    %948 = vmatprep.subr.bf16.mxu0 0
    %949 = vmatpush1.bf16.msra.mxu0 %v933
    %950 = vmatprep.subr.bf16.mxu0 0
    %951 = vmatpush1.bf16.msra.mxu0 %v934
    %952 = vmatprep.subr.bf16.mxu0 0
    %953 = vmatpush1.bf16.msra.mxu0 %v935
    %954 = vmatprep.subr.bf16.mxu0 0
    %955 = vmatpush1.bf16.msra.mxu0 0
    %956 = vmatprep.subr.bf16.mxu0 0
    %957 = vmatpush1.bf16.msra.mxu0 0
    %958 = vmatprep.subr.bf16.mxu0 0
    %959 = vmatpush1.bf16.msra.mxu0 0
    %960 = vmatprep.subr.bf16.mxu0 0
    %961 = vmatpush1.bf16.msra.mxu0 0
    %962 = vmatprep.subr.bf16.mxu0 0
    %963 = vmatpush1.bf16.msra.mxu0 0
    %964 = vmatprep.subr.bf16.mxu0 0
    %965 = vmatpush1.bf16.msra.mxu0 0
    %966 = vmatprep.subr.bf16.mxu0 0
    %967 = vmatpush1.bf16.msra.mxu0 0
    %968 = vmatprep.subr.bf16.mxu0 0
    %969 = vmatpush1.bf16.msra.mxu0 0
    %970 = vmatprep.subr.bf16.mxu0 0
    %971 = vmatpush1.bf16.msra.mxu0 0
    %972 = vmatprep.subr.bf16.mxu0 0
    %973 = vmatpush1.bf16.msra.mxu0 0
    %974 = vmatprep.subr.bf16.mxu0 0
    %975 = vmatpush1.bf16.msra.mxu0 0
    %976 = vmatprep.subr.bf16.mxu0 0
    %977 = vmatpush1.bf16.msra.mxu0 0
    %978 = vmatprep.mubr.bf16.mxu0 0
    %979 = vmatmul.mubr.bf16.gmra.mrb[0].mxu0 %v941
    %v980 = vpop.f32.mrb[0].mxu0
    %v981 = vadd.f32 %v902, %v980
    %v982 = vpop.f32.mrb[0].mxu0
    %v983 = vpop.f32.mrb[0].mxu0
    %v984 = vadd.f32 %v905, %v983
    %v985 = vpop.f32.mrb[0].mxu0
    %986 = vmatprep.mubr.bf16.mxu0 0
    %987 = vmatmul.mubr.bf16.gmra.mrb[0].mxu0 %v944
    %v988 = vpop.f32.mrb[0].mxu0
    %v989 = vadd.f32 %v910, %v988
    %v990 = vpop.f32.mrb[0].mxu0
    %v991 = vpop.f32.mrb[0].mxu0
    %v992 = vadd.f32 %v913, %v991
    %v993 = vpop.f32.mrb[0].mxu0
    %994 = vdwg.mxu0
    %s995 = scalar_lea.vmem [#allocation2], 64
    %v996 = vld [vmem:[%s995] sm:$0xf]
    %v997 = vld [vmem:[%s995 + $0x4] sm:$0xf]
    %v998 = vld [vmem:[%s995 + $0x8] sm:$0xf]
    %v999 = vld [vmem:[%s995 + $0xc] sm:$0xf]
    %v1000 = vld [vmem:[%s995 + $0x10] sm:$0xf]
    %v1001 = vld [vmem:[%s995 + $0x14] sm:$0xf]
    %v1002 = vld [vmem:[%s995 + $0x18] sm:$0xf]
    %v1003 = vld [vmem:[%s995 + $0x1c] sm:$0xf]
    %v1012 = vunpack.c.l.b16 %v996
    %v1013 = vunpack.c.l.b16 %v997
    %v1014 = vunpack.c.l.b16 %v998
    %v1015 = vunpack.c.l.b16 %v999
    %v1016 = vunpack.c.l.b16 %v1000
    %v1017 = vunpack.c.l.b16 %v1001
    %v1018 = vunpack.c.l.b16 %v1002
    %v1019 = vunpack.c.l.b16 %v1003
    %v1020 = vpack.c.b16 %v1013, %v1012
    %v1021 = vpack.c.b16 %v1015, %v1014
    %v1022 = vpack.c.b16 %v1017, %v1016
    %v1023 = vpack.c.b16 %v1019, %v1018
    %v1029 = vsel %vm266, %v818, 0
    %v1032 = vsel %vm266, %v819, 0
    %1034 = vmatprep.subr.bf16.mxu0 0
    %1035 = vmatpush1.bf16.msra.mxu0 %v1020
    %1036 = vmatprep.subr.bf16.mxu0 0
    %1037 = vmatpush1.bf16.msra.mxu0 %v1021
    %1038 = vmatprep.subr.bf16.mxu0 0
    %1039 = vmatpush1.bf16.msra.mxu0 %v1022
    %1040 = vmatprep.subr.bf16.mxu0 0
    %1041 = vmatpush1.bf16.msra.mxu0 %v1023
    %1042 = vmatprep.subr.bf16.mxu0 0
    %1043 = vmatpush1.bf16.msra.mxu0 0
    %1044 = vmatprep.subr.bf16.mxu0 0
    %1045 = vmatpush1.bf16.msra.mxu0 0
    %1046 = vmatprep.subr.bf16.mxu0 0
    %1047 = vmatpush1.bf16.msra.mxu0 0
    %1048 = vmatprep.subr.bf16.mxu0 0
    %1049 = vmatpush1.bf16.msra.mxu0 0
    %1050 = vmatprep.subr.bf16.mxu0 0
    %1051 = vmatpush1.bf16.msra.mxu0 0
    %1052 = vmatprep.subr.bf16.mxu0 0
    %1053 = vmatpush1.bf16.msra.mxu0 0
    %1054 = vmatprep.subr.bf16.mxu0 0
    %1055 = vmatpush1.bf16.msra.mxu0 0
    %1056 = vmatprep.subr.bf16.mxu0 0
    %1057 = vmatpush1.bf16.msra.mxu0 0
    %1058 = vmatprep.subr.bf16.mxu0 0
    %1059 = vmatpush1.bf16.msra.mxu0 0
    %1060 = vmatprep.subr.bf16.mxu0 0
    %1061 = vmatpush1.bf16.msra.mxu0 0
    %1062 = vmatprep.subr.bf16.mxu0 0
    %1063 = vmatpush1.bf16.msra.mxu0 0
    %1064 = vmatprep.subr.bf16.mxu0 0
    %1065 = vmatpush1.bf16.msra.mxu0 0
    %1066 = vmatprep.mubr.bf16.mxu0 0
    %1067 = vmatmul.mubr.bf16.gmra.mrb[0].mxu0 %v1029
    %v1068 = vpop.f32.mrb[0].mxu0
    %v1069 = vadd.f32 0.0, %v1068
    %v1070 = vpop.f32.mrb[0].mxu0
    %v1071 = vpop.f32.mrb[0].mxu0
    %v1072 = vadd.f32 0.0, %v1071
    %v1073 = vpop.f32.mrb[0].mxu0
    %1074 = vmatprep.mubr.bf16.mxu0 0
    %1075 = vmatmul.mubr.bf16.gmra.mrb[0].mxu0 %v1032
    %v1076 = vpop.f32.mrb[0].mxu0
    %v1077 = vadd.f32 0.0, %v1076
    %v1078 = vpop.f32.mrb[0].mxu0
    %v1079 = vpop.f32.mrb[0].mxu0
    %v1080 = vadd.f32 0.0, %v1079
    %v1081 = vpop.f32.mrb[0].mxu0
    %1082 = vdwg.mxu0
    %v1083 = vadd.f32 %v981, %v1069
    %v1084 = vadd.f32 %v984, %v1072
    %v1085 = vadd.f32 %v989, %v1077
    %v1086 = vadd.f32 %v992, %v1080
    %v1087 = vld [vmem:[%s7] sm:$0xff]
    %v1088 = vld [vmem:[%s7 + $0x8] sm:$0xff]
    %v1089 = vld [vmem:[%s7 + $0x10] sm:$0xff]
    %v1090 = vld [vmem:[%s7 + $0x18] sm:$0xff]
    %v1091 = vld [vmem:[%s7 + $0x20] sm:$0xff]
    %v1092 = vld [vmem:[%s7 + $0x28] sm:$0xff]
    %v1093 = vld [vmem:[%s7 + $0x30] sm:$0xff]
    %v1094 = vld [vmem:[%s7 + $0x38] sm:$0xff]
    %v1095 = vld [vmem:[%s7 + $0x40] sm:$0xff]
    %v1096 = vld [vmem:[%s7 + $0x48] sm:$0xff]
    %v1097 = vld [vmem:[%s7 + $0x50] sm:$0xff]
    %v1098 = vld [vmem:[%s7 + $0x58] sm:$0xff]
    %v1099 = vld [vmem:[%s7 + $0x60] sm:$0xff]
    %v1100 = vld [vmem:[%s7 + $0x68] sm:$0xff]
    %v1101 = vld [vmem:[%s7 + $0x70] sm:$0xff]
    %v1102 = vld [vmem:[%s7 + $0x78] sm:$0xff]
    %v1103 = vadd.f32 %v1083, %v1084
    %v1104 = vadd.f32 %v1103, %v1085
    %v1105 = vadd.f32 %v1104, %v1086
    %v1106 = vrot.slane %v1105, 4
    %v1107 = vadd.f32 %v1105, %v1106
    %v1108 = vrot.slane %v1107, 2
    %v1109 = vadd.f32 %v1107, %v1108
    %v1110 = vrot.slane %v1109, 1
    %v1111 = vadd.f32 %v1109, %v1110
    %1112 = vmatprep.subr.mxu0 0.0
    %1113 = vmatpush1.msra.mxu0 %v1087
    %1114 = vmatprep.subr.mxu0 0.0
    %1115 = vmatpush1.msra.mxu0 %v1088
    %1116 = vmatprep.subr.mxu0 0.0
    %1117 = vmatpush1.msra.mxu0 %v1089
    %1118 = vmatprep.subr.mxu0 0.0
    %1119 = vmatpush1.msra.mxu0 %v1090
    %1120 = vmatprep.subr.mxu0 0.0
    %1121 = vmatpush1.msra.mxu0 %v1091
    %1122 = vmatprep.subr.mxu0 0.0
    %1123 = vmatpush1.msra.mxu0 %v1092
    %1124 = vmatprep.subr.mxu0 0.0
    %1125 = vmatpush1.msra.mxu0 %v1093
    %1126 = vmatprep.subr.mxu0 0.0
    %1127 = vmatpush1.msra.mxu0 %v1094
    %1128 = vmatprep.subr.mxu0 0.0
    %1129 = vmatpush1.msra.mxu0 %v1095
    %1130 = vmatprep.subr.mxu0 0.0
    %1131 = vmatpush1.msra.mxu0 %v1096
    %1132 = vmatprep.subr.mxu0 0.0
    %1133 = vmatpush1.msra.mxu0 %v1097
    %1134 = vmatprep.subr.mxu0 0.0
    %1135 = vmatpush1.msra.mxu0 %v1098
    %1136 = vmatprep.subr.mxu0 0.0
    %1137 = vmatpush1.msra.mxu0 %v1099
    %1138 = vmatprep.subr.mxu0 0.0
    %1139 = vmatpush1.msra.mxu0 %v1100
    %1140 = vmatprep.subr.mxu0 0.0
    %1141 = vmatpush1.msra.mxu0 %v1101
    %1142 = vmatprep.subr.mxu0 0.0
    %1143 = vmatpush1.msra.mxu0 %v1102
    %1144 = vmatprep.subr.mxu0 0.0
    %1145 = vmatpush1.msra.mxu0 0.0
    %1146 = vmatprep.subr.mxu0 0.0
    %1147 = vmatpush1.msra.mxu0 0.0
    %1148 = vmatprep.subr.mxu0 0.0
    %1149 = vmatpush1.msra.mxu0 0.0
    %1150 = vmatprep.subr.mxu0 0.0
    %1151 = vmatpush1.msra.mxu0 0.0
    %1152 = vmatprep.subr.mxu0 0.0
    %1153 = vmatpush1.msra.mxu0 0.0
    %1154 = vmatprep.subr.mxu0 0.0
    %1155 = vmatpush1.msra.mxu0 0.0
    %1156 = vmatprep.subr.mxu0 0.0
    %1157 = vmatpush1.msra.mxu0 0.0
    %1158 = vmatprep.subr.mxu0 0.0
    %1159 = vmatpush1.msra.mxu0 0.0
    %1160 = vmatprep.subr.mxu0 0.0
    %1161 = vmatpush1.msra.mxu0 0.0
    %1162 = vmatprep.subr.mxu0 0.0
    %1163 = vmatpush1.msra.mxu0 0.0
    %1164 = vmatprep.subr.mxu0 0.0
    %1165 = vmatpush1.msra.mxu0 0.0
    %1166 = vmatprep.subr.mxu0 0.0
    %1167 = vmatpush1.msra.mxu0 0.0
    %1168 = vmatprep.subr.mxu0 0.0
    %1169 = vmatpush1.msra.mxu0 0.0
    %1170 = vmatprep.subr.mxu0 0.0
    %1171 = vmatpush1.msra.mxu0 0.0
    %1172 = vmatprep.subr.mxu0 0.0
    %1173 = vmatpush1.msra.mxu0 0.0
    %1174 = vmatprep.subr.mxu0 0.0
    %1175 = vmatpush1.msra.mxu0 0.0
    %1176 = vmatprep.mubr.f32.mxu0 0.0
    %1177 = vmatmul.mubr.f32.gmra.mrb[0].mxu0 %v1111
    %v1178 = vpop.f32.mrb[0].mxu0
    %v1179 = vadd.f32 0.0, %v1178
    %v1180 = vpop.f32.mrb[0].mxu0
    %1181 = vdwg.mxu0
    %v1182 = vmul.f32 %v1179, 0.001953125
    %v1183 = vlaneseq
    %v1184 = vshrl.u32 %v1183, 7
    %v1185 = vsub.s32 0, %v1184
    %v1186 = vrot.slane %v1182, %v1185
    %v1187 = vsub.f32 %v1083, %v1186
    %v1188 = vsub.f32 %v1084, %v1186
    %v1189 = vsub.f32 %v1085, %v1186
    %v1190 = vsub.f32 %v1086, %v1186
    %v1191 = vmul.f32 %v1187, %v1187
    %v1192 = vmul.f32 %v1188, %v1188
    %v1193 = vmul.f32 %v1189, %v1189
    %v1194 = vmul.f32 %v1190, %v1190
    %v1195 = vadd.f32 %v1191, %v1192
    %v1196 = vadd.f32 %v1195, %v1193
    %v1197 = vadd.f32 %v1196, %v1194
    %v1198 = vrot.slane %v1197, 4
    %v1199 = vadd.f32 %v1197, %v1198
    %v1200 = vrot.slane %v1199, 2
    %v1201 = vadd.f32 %v1199, %v1200
    %v1202 = vrot.slane %v1201, 1
    %v1203 = vadd.f32 %v1201, %v1202
    %1204 = vmatprep.subr.mxu0 0.0
    %1205 = vmatpush1.msra.mxu0 %v1087
    %1206 = vmatprep.subr.mxu0 0.0
    %1207 = vmatpush1.msra.mxu0 %v1088
    %1208 = vmatprep.subr.mxu0 0.0
    %1209 = vmatpush1.msra.mxu0 %v1089
    %1210 = vmatprep.subr.mxu0 0.0
    %1211 = vmatpush1.msra.mxu0 %v1090
    %1212 = vmatprep.subr.mxu0 0.0
    %1213 = vmatpush1.msra.mxu0 %v1091
    %1214 = vmatprep.subr.mxu0 0.0
    %1215 = vmatpush1.msra.mxu0 %v1092
    %1216 = vmatprep.subr.mxu0 0.0
    %1217 = vmatpush1.msra.mxu0 %v1093
    %1218 = vmatprep.subr.mxu0 0.0
    %1219 = vmatpush1.msra.mxu0 %v1094
    %1220 = vmatprep.subr.mxu0 0.0
    %1221 = vmatpush1.msra.mxu0 %v1095
    %1222 = vmatprep.subr.mxu0 0.0
    %1223 = vmatpush1.msra.mxu0 %v1096
    %1224 = vmatprep.subr.mxu0 0.0
    %1225 = vmatpush1.msra.mxu0 %v1097
    %1226 = vmatprep.subr.mxu0 0.0
    %1227 = vmatpush1.msra.mxu0 %v1098
    %1228 = vmatprep.subr.mxu0 0.0
    %1229 = vmatpush1.msra.mxu0 %v1099
    %1230 = vmatprep.subr.mxu0 0.0
    %1231 = vmatpush1.msra.mxu0 %v1100
    %1232 = vmatprep.subr.mxu0 0.0
    %1233 = vmatpush1.msra.mxu0 %v1101
    %1234 = vmatprep.subr.mxu0 0.0
    %1235 = vmatpush1.msra.mxu0 %v1102
    %1236 = vmatprep.subr.mxu0 0.0
    %1237 = vmatpush1.msra.mxu0 0.0
    %1238 = vmatprep.subr.mxu0 0.0
    %1239 = vmatpush1.msra.mxu0 0.0
    %1240 = vmatprep.subr.mxu0 0.0
    %1241 = vmatpush1.msra.mxu0 0.0
    %1242 = vmatprep.subr.mxu0 0.0
    %1243 = vmatpush1.msra.mxu0 0.0
    %1244 = vmatprep.subr.mxu0 0.0
    %1245 = vmatpush1.msra.mxu0 0.0
    %1246 = vmatprep.subr.mxu0 0.0
    %1247 = vmatpush1.msra.mxu0 0.0
    %1248 = vmatprep.subr.mxu0 0.0
    %1249 = vmatpush1.msra.mxu0 0.0
    %1250 = vmatprep.subr.mxu0 0.0
    %1251 = vmatpush1.msra.mxu0 0.0
    %1252 = vmatprep.subr.mxu0 0.0
    %1253 = vmatpush1.msra.mxu0 0.0
    %1254 = vmatprep.subr.mxu0 0.0
    %1255 = vmatpush1.msra.mxu0 0.0
    %1256 = vmatprep.subr.mxu0 0.0
    %1257 = vmatpush1.msra.mxu0 0.0
    %1258 = vmatprep.subr.mxu0 0.0
    %1259 = vmatpush1.msra.mxu0 0.0
    %1260 = vmatprep.subr.mxu0 0.0
    %1261 = vmatpush1.msra.mxu0 0.0
    %1262 = vmatprep.subr.mxu0 0.0
    %1263 = vmatpush1.msra.mxu0 0.0
    %1264 = vmatprep.subr.mxu0 0.0
    %1265 = vmatpush1.msra.mxu0 0.0
    %1266 = vmatprep.subr.mxu0 0.0
    %1267 = vmatpush1.msra.mxu0 0.0
    %1268 = vmatprep.mubr.f32.mxu0 0.0
    %1269 = vmatmul.mubr.f32.gmra.mrb[0].mxu0 %v1203
    %v1270 = vpop.f32.mrb[0].mxu0
    %v1271 = vadd.f32 0.0, %v1270
    %v1272 = vpop.f32.mrb[0].mxu0
    %1273 = vdwg.mxu0
    %v1274 = vmul.f32 %v1271, 0.001953125
    %v1275 = vld [vmem:[%s10] sm:$0x1]
    %v1276 = vadd.f32 %v1274, 1e-05
    %v1277 = vrsqrt.pop %v1276
    %v1278 = vmul.f32 %v1275, %v1277
    %v1280 = vlaneseq
    %v1281 = vshrl.u32 %v1280, 7
    %v1282 = vsub.s32 0, %v1281
    %v1283 = vrot.slane %v1278, %v1282
    %v1285 = vmul.f32 %v1187, %v1283
    %v1286 = vmul.f32 %v1188, %v1283
    %v1287 = vmul.f32 %v1189, %v1283
    %v1288 = vmul.f32 %v1190, %v1283
    %v1289 = vld [vmem:[%s11] sm:$0x1]
    %v1291 = vlaneseq
    %v1292 = vshrl.u32 %v1291, 7
    %v1293 = vsub.s32 0, %v1292
    %v1294 = vrot.slane %v1289, %v1293
    %v1296 = vadd.f32 %v1285, %v1294
    %v1297 = vadd.f32 %v1286, %v1294
    %v1298 = vadd.f32 %v1287, %v1294
    %v1299 = vadd.f32 %v1288, %v1294
    %v1300 = vmax.f32 %v1296, 0.0
    %v1301 = vmax.f32 %v1297, 0.0
    %v1302 = vmax.f32 %v1298, 0.0
    %v1303 = vmax.f32 %v1299, 0.0
    %v1304 = vpack.c.bf16 %v1301, %v1300
    %v1305 = vpack.c.bf16 %v1303, %v1302
    %1306 = vmatprep.subr.bf16.mxu0 0
    %1307 = vmatpush1.bf16.msra.mxu0 %v1304
    %1308 = vmatprep.subr.bf16.mxu0 0
    %1309 = vmatpush1.bf16.msra.mxu0 %v1305
    %1310 = vmatprep.subr.bf16.mxu0 0
    %1311 = vmatpush1.bf16.msra.mxu0 0
    %1312 = vmatprep.subr.bf16.mxu0 0
    %1313 = vmatpush1.bf16.msra.mxu0 0
    %1314 = vmatprep.subr.bf16.mxu0 0
    %1315 = vmatpush1.bf16.msra.mxu0 0
    %1316 = vmatprep.subr.bf16.mxu0 0
    %1317 = vmatpush1.bf16.msra.mxu0 0
    %1318 = vmatprep.subr.bf16.mxu0 0
    %1319 = vmatpush1.bf16.msra.mxu0 0
    %1320 = vmatprep.subr.bf16.mxu0 0
    %1321 = vmatpush1.bf16.msra.mxu0 0
    %1322 = vmatprep.subr.bf16.mxu0 0
    %1323 = vmatpush1.bf16.msra.mxu0 0
    %1324 = vmatprep.subr.bf16.mxu0 0
    %1325 = vmatpush1.bf16.msra.mxu0 0
    %1326 = vmatprep.subr.bf16.mxu0 0
    %1327 = vmatpush1.bf16.msra.mxu0 0
    %1328 = vmatprep.subr.bf16.mxu0 0
    %1329 = vmatpush1.bf16.msra.mxu0 0
    %1330 = vmatprep.subr.bf16.mxu0 0
    %1331 = vmatpush1.bf16.msra.mxu0 0
    %1332 = vmatprep.subr.bf16.mxu0 0
    %1333 = vmatpush1.bf16.msra.mxu0 0
    %1334 = vmatprep.subr.bf16.mxu0 0
    %1335 = vmatpush1.bf16.msra.mxu0 0
    %1336 = vmatprep.subr.bf16.mxu0 0
    %1337 = vmatpush1.bf16.msra.mxu0 0
    %1338 = vmatprep.mubr.bf16.mxu0 0
    %1339 = vmatmul.mubr.bf16.gmra.mrb[0].mxu0 %v102
    %v1340 = vpop.f32.mrb[0].mxu0
    %v1341 = vadd.f32 0.0, %v1340
    %v1342 = vpop.f32.mrb[0].mxu0
    %v1343 = vpop.f32.mrb[0].mxu0
    %v1344 = vadd.f32 0.0, %v1343
    %v1345 = vpop.f32.mrb[0].mxu0
    %1346 = vmatprep.mubr.bf16.mxu0 0
    %1347 = vmatmul.mubr.bf16.gmra.mrb[0].mxu0 %v105
    %v1348 = vpop.f32.mrb[0].mxu0
    %v1349 = vadd.f32 0.0, %v1348
    %v1350 = vpop.f32.mrb[0].mxu0
    %v1351 = vpop.f32.mrb[0].mxu0
    %v1352 = vadd.f32 0.0, %v1351
    %v1353 = vpop.f32.mrb[0].mxu0
    %1354 = vdwg.mxu0
    %v1355 = vpack.c.bf16 %v1344, %v1341
    %v1356 = vpack.c.bf16 %v1352, %v1349
    %1357 = vmatprep.subr.bf16.mxu0 0
    %1358 = vmatpush1.bf16.msra.mxu0 %v1304
    %1359 = vmatprep.subr.bf16.mxu0 0
    %1360 = vmatpush1.bf16.msra.mxu0 %v1305
    %1361 = vmatprep.subr.bf16.mxu0 0
    %1362 = vmatpush1.bf16.msra.mxu0 0
    %1363 = vmatprep.subr.bf16.mxu0 0
    %1364 = vmatpush1.bf16.msra.mxu0 0
    %1365 = vmatprep.subr.bf16.mxu0 0
    %1366 = vmatpush1.bf16.msra.mxu0 0
    %1367 = vmatprep.subr.bf16.mxu0 0
    %1368 = vmatpush1.bf16.msra.mxu0 0
    %1369 = vmatprep.subr.bf16.mxu0 0
    %1370 = vmatpush1.bf16.msra.mxu0 0
    %1371 = vmatprep.subr.bf16.mxu0 0
    %1372 = vmatpush1.bf16.msra.mxu0 0
    %1373 = vmatprep.subr.bf16.mxu0 0
    %1374 = vmatpush1.bf16.msra.mxu0 0
    %1375 = vmatprep.subr.bf16.mxu0 0
    %1376 = vmatpush1.bf16.msra.mxu0 0
    %1377 = vmatprep.subr.bf16.mxu0 0
    %1378 = vmatpush1.bf16.msra.mxu0 0
    %1379 = vmatprep.subr.bf16.mxu0 0
    %1380 = vmatpush1.bf16.msra.mxu0 0
    %1381 = vmatprep.subr.bf16.mxu0 0
    %1382 = vmatpush1.bf16.msra.mxu0 0
    %1383 = vmatprep.subr.bf16.mxu0 0
    %1384 = vmatpush1.bf16.msra.mxu0 0
    %1385 = vmatprep.subr.bf16.mxu0 0
    %1386 = vmatpush1.bf16.msra.mxu0 0
    %1387 = vmatprep.subr.bf16.mxu0 0
    %1388 = vmatpush1.bf16.msra.mxu0 0
    %1389 = vmatprep.mubr.bf16.mxu0 0
    %1390 = vmatmul.mubr.bf16.gmra.mrb[0].mxu0 %v169
    %v1391 = vpop.f32.mrb[0].mxu0
    %v1392 = vadd.f32 0.0, %v1391
    %v1393 = vpop.f32.mrb[0].mxu0
    %v1394 = vpop.f32.mrb[0].mxu0
    %v1395 = vadd.f32 0.0, %v1394
    %v1396 = vpop.f32.mrb[0].mxu0
    %1397 = vmatprep.mubr.bf16.mxu0 0
    %1398 = vmatmul.mubr.bf16.gmra.mrb[0].mxu0 %v172
    %v1399 = vpop.f32.mrb[0].mxu0
    %v1400 = vadd.f32 0.0, %v1399
    %v1401 = vpop.f32.mrb[0].mxu0
    %v1402 = vpop.f32.mrb[0].mxu0
    %v1403 = vadd.f32 0.0, %v1402
    %v1404 = vpop.f32.mrb[0].mxu0
    %1405 = vdwg.mxu0
    %v1406 = vpack.c.bf16 %v1395, %v1392
    %v1407 = vpack.c.bf16 %v1403, %v1400
    %v1408 = vld [vmem:[%s5] sm:$0xf]
    %v1409 = vld [vmem:[%s5 + $0x4] sm:$0xf]
    %v1410 = vld [vmem:[%s5 + $0x8] sm:$0xf]
    %v1411 = vld [vmem:[%s5 + $0xc] sm:$0xf]
    %v1412 = vld [vmem:[%s5 + $0x10] sm:$0xf]
    %v1413 = vld [vmem:[%s5 + $0x14] sm:$0xf]
    %v1414 = vld [vmem:[%s5 + $0x18] sm:$0xf]
    %v1415 = vld [vmem:[%s5 + $0x1c] sm:$0xf]
    %v1416 = vld [vmem:[%s5 + $0x20] sm:$0xf]
    %v1417 = vld [vmem:[%s5 + $0x24] sm:$0xf]
    %v1418 = vld [vmem:[%s5 + $0x28] sm:$0xf]
    %v1419 = vld [vmem:[%s5 + $0x2c] sm:$0xf]
    %v1420 = vld [vmem:[%s5 + $0x30] sm:$0xf]
    %v1421 = vld [vmem:[%s5 + $0x34] sm:$0xf]
    %v1422 = vld [vmem:[%s5 + $0x38] sm:$0xf]
    %v1423 = vld [vmem:[%s5 + $0x3c] sm:$0xf]
    %s1424 = scalar_lea.vmem %s5, 64
    %v1425 = vld [vmem:[%s1424] sm:$0xf]
    %v1426 = vld [vmem:[%s1424 + $0x4] sm:$0xf]
    %v1427 = vld [vmem:[%s1424 + $0x8] sm:$0xf]
    %v1428 = vld [vmem:[%s1424 + $0xc] sm:$0xf]
    %v1429 = vld [vmem:[%s1424 + $0x10] sm:$0xf]
    %v1430 = vld [vmem:[%s1424 + $0x14] sm:$0xf]
    %v1431 = vld [vmem:[%s1424 + $0x18] sm:$0xf]
    %v1432 = vld [vmem:[%s1424 + $0x1c] sm:$0xf]
    %v1433 = vld [vmem:[%s1424 + $0x20] sm:$0xf]
    %v1434 = vld [vmem:[%s1424 + $0x24] sm:$0xf]
    %v1435 = vld [vmem:[%s1424 + $0x28] sm:$0xf]
    %v1436 = vld [vmem:[%s1424 + $0x2c] sm:$0xf]
    %v1437 = vld [vmem:[%s1424 + $0x30] sm:$0xf]
    %v1438 = vld [vmem:[%s1424 + $0x34] sm:$0xf]
    %v1439 = vld [vmem:[%s1424 + $0x38] sm:$0xf]
    %v1440 = vld [vmem:[%s1424 + $0x3c] sm:$0xf]
    %v1457 = vunpack.c.l.b16 %v1425
    %v1458 = vunpack.c.l.b16 %v1426
    %v1459 = vunpack.c.l.b16 %v1427
    %v1460 = vunpack.c.l.b16 %v1428
    %v1461 = vunpack.c.l.b16 %v1429
    %v1462 = vunpack.c.l.b16 %v1430
    %v1463 = vunpack.c.l.b16 %v1431
    %v1464 = vunpack.c.l.b16 %v1432
    %v1465 = vunpack.c.l.b16 %v1433
    %v1466 = vunpack.c.l.b16 %v1434
    %v1467 = vunpack.c.l.b16 %v1435
    %v1468 = vunpack.c.l.b16 %v1436
    %v1469 = vunpack.c.l.b16 %v1437
    %v1470 = vunpack.c.l.b16 %v1438
    %v1471 = vunpack.c.l.b16 %v1439
    %v1472 = vunpack.c.l.b16 %v1440
    %v1473 = vpack.c.b16 %v1458, %v1457
    %v1474 = vpack.c.b16 %v1460, %v1459
    %v1475 = vpack.c.b16 %v1462, %v1461
    %v1476 = vpack.c.b16 %v1464, %v1463
    %v1477 = vpack.c.b16 %v1466, %v1465
    %v1478 = vpack.c.b16 %v1468, %v1467
    %v1479 = vpack.c.b16 %v1470, %v1469
    %v1480 = vpack.c.b16 %v1472, %v1471
    %1489 = vmatprep.subr.bf16.mxu0 0
    %1490 = vmatpush1.bf16.msra.mxu0 %v1473
    %1491 = vmatprep.subr.bf16.mxu0 0
    %1492 = vmatpush1.bf16.msra.mxu0 %v1474
    %1493 = vmatprep.subr.bf16.mxu0 0
    %1494 = vmatpush1.bf16.msra.mxu0 %v1475
    %1495 = vmatprep.subr.bf16.mxu0 0
    %1496 = vmatpush1.bf16.msra.mxu0 %v1476
    %1497 = vmatprep.subr.bf16.mxu0 0
    %1498 = vmatpush1.bf16.msra.mxu0 %v1477
    %1499 = vmatprep.subr.bf16.mxu0 0
    %1500 = vmatpush1.bf16.msra.mxu0 %v1478
    %1501 = vmatprep.subr.bf16.mxu0 0
    %1502 = vmatpush1.bf16.msra.mxu0 %v1479
    %1503 = vmatprep.subr.bf16.mxu0 0
    %1504 = vmatpush1.bf16.msra.mxu0 %v1480
    %1505 = vmatprep.subr.bf16.mxu0 0
    %1506 = vmatpush1.bf16.msra.mxu0 0
    %1507 = vmatprep.subr.bf16.mxu0 0
    %1508 = vmatpush1.bf16.msra.mxu0 0
    %1509 = vmatprep.subr.bf16.mxu0 0
    %1510 = vmatpush1.bf16.msra.mxu0 0
    %1511 = vmatprep.subr.bf16.mxu0 0
    %1512 = vmatpush1.bf16.msra.mxu0 0
    %1513 = vmatprep.subr.bf16.mxu0 0
    %1514 = vmatpush1.bf16.msra.mxu0 0
    %1515 = vmatprep.subr.bf16.mxu0 0
    %1516 = vmatpush1.bf16.msra.mxu0 0
    %1517 = vmatprep.subr.bf16.mxu0 0
    %1518 = vmatpush1.bf16.msra.mxu0 0
    %1519 = vmatprep.subr.bf16.mxu0 0
    %1520 = vmatpush1.bf16.msra.mxu0 0
    %1521 = vmatprep.mubr.bf16.mxu0 0
    %1522 = vmatmul.mubr.bf16.gmra.mrb[0].mxu0 %v1304
    %v1523 = vpop.f32.mrb[0].mxu0
    %v1524 = vadd.f32 0.0, %v1523
    %v1525 = vpop.f32.mrb[0].mxu0
    %v1526 = vpop.f32.mrb[0].mxu0
    %v1527 = vadd.f32 0.0, %v1526
    %v1528 = vpop.f32.mrb[0].mxu0
    %1529 = vmatprep.mubr.bf16.mxu0 0
    %1530 = vmatmul.mubr.bf16.gmra.mrb[0].mxu0 %v1305
    %v1531 = vpop.f32.mrb[0].mxu0
    %v1532 = vadd.f32 0.0, %v1531
    %v1533 = vpop.f32.mrb[0].mxu0
    %v1534 = vpop.f32.mrb[0].mxu0
    %v1535 = vadd.f32 0.0, %v1534
    %v1536 = vpop.f32.mrb[0].mxu0
    %1537 = vdwg.mxu0
    %v1554 = vunpack.c.l.b16 %v1408
    %v1555 = vunpack.c.l.b16 %v1409
    %v1556 = vunpack.c.l.b16 %v1410
    %v1557 = vunpack.c.l.b16 %v1411
    %v1558 = vunpack.c.l.b16 %v1412
    %v1559 = vunpack.c.l.b16 %v1413
    %v1560 = vunpack.c.l.b16 %v1414
    %v1561 = vunpack.c.l.b16 %v1415
    %v1562 = vunpack.c.l.b16 %v1416
    %v1563 = vunpack.c.l.b16 %v1417
    %v1564 = vunpack.c.l.b16 %v1418
    %v1565 = vunpack.c.l.b16 %v1419
    %v1566 = vunpack.c.l.b16 %v1420
    %v1567 = vunpack.c.l.b16 %v1421
    %v1568 = vunpack.c.l.b16 %v1422
    %v1569 = vunpack.c.l.b16 %v1423
    %v1570 = vpack.c.b16 %v1555, %v1554
    %v1571 = vpack.c.b16 %v1557, %v1556
    %v1572 = vpack.c.b16 %v1559, %v1558
    %v1573 = vpack.c.b16 %v1561, %v1560
    %v1574 = vpack.c.b16 %v1563, %v1562
    %v1575 = vpack.c.b16 %v1565, %v1564
    %v1576 = vpack.c.b16 %v1567, %v1566
    %v1577 = vpack.c.b16 %v1569, %v1568
    %1586 = vmatprep.subr.bf16.mxu0 0
    %1587 = vmatpush1.bf16.msra.mxu0 %v1570
    %1588 = vmatprep.subr.bf16.mxu0 0
    %1589 = vmatpush1.bf16.msra.mxu0 %v1571
    %1590 = vmatprep.subr.bf16.mxu0 0
    %1591 = vmatpush1.bf16.msra.mxu0 %v1572
    %1592 = vmatprep.subr.bf16.mxu0 0
    %1593 = vmatpush1.bf16.msra.mxu0 %v1573
    %1594 = vmatprep.subr.bf16.mxu0 0
    %1595 = vmatpush1.bf16.msra.mxu0 %v1574
    %1596 = vmatprep.subr.bf16.mxu0 0
    %1597 = vmatpush1.bf16.msra.mxu0 %v1575
    %1598 = vmatprep.subr.bf16.mxu0 0
    %1599 = vmatpush1.bf16.msra.mxu0 %v1576
    %1600 = vmatprep.subr.bf16.mxu0 0
    %1601 = vmatpush1.bf16.msra.mxu0 %v1577
    %1602 = vmatprep.subr.bf16.mxu0 0
    %1603 = vmatpush1.bf16.msra.mxu0 0
    %1604 = vmatprep.subr.bf16.mxu0 0
    %1605 = vmatpush1.bf16.msra.mxu0 0
    %1606 = vmatprep.subr.bf16.mxu0 0
    %1607 = vmatpush1.bf16.msra.mxu0 0
    %1608 = vmatprep.subr.bf16.mxu0 0
    %1609 = vmatpush1.bf16.msra.mxu0 0
    %1610 = vmatprep.subr.bf16.mxu0 0
    %1611 = vmatpush1.bf16.msra.mxu0 0
    %1612 = vmatprep.subr.bf16.mxu0 0
    %1613 = vmatpush1.bf16.msra.mxu0 0
    %1614 = vmatprep.subr.bf16.mxu0 0
    %1615 = vmatpush1.bf16.msra.mxu0 0
    %1616 = vmatprep.subr.bf16.mxu0 0
    %1617 = vmatpush1.bf16.msra.mxu0 0
    %1618 = vmatprep.mubr.bf16.mxu0 0
    %1619 = vmatmul.mubr.bf16.gmra.mrb[0].mxu0 %v1355
    %v1620 = vpop.f32.mrb[0].mxu0
    %v1621 = vadd.f32 %v1524, %v1620
    %v1622 = vpop.f32.mrb[0].mxu0
    %v1623 = vpop.f32.mrb[0].mxu0
    %v1624 = vadd.f32 %v1527, %v1623
    %v1625 = vpop.f32.mrb[0].mxu0
    %1626 = vmatprep.mubr.bf16.mxu0 0
    %1627 = vmatmul.mubr.bf16.gmra.mrb[0].mxu0 %v1356
    %v1628 = vpop.f32.mrb[0].mxu0
    %v1629 = vadd.f32 %v1532, %v1628
    %v1630 = vpop.f32.mrb[0].mxu0
    %v1631 = vpop.f32.mrb[0].mxu0
    %v1632 = vadd.f32 %v1535, %v1631
    %v1633 = vpop.f32.mrb[0].mxu0
    %1634 = vdwg.mxu0
    %s1635 = scalar_lea.vmem %s5, 128
    %v1636 = vld [vmem:[%s1635] sm:$0xf]
    %v1637 = vld [vmem:[%s1635 + $0x4] sm:$0xf]
    %v1638 = vld [vmem:[%s1635 + $0x8] sm:$0xf]
    %v1639 = vld [vmem:[%s1635 + $0xc] sm:$0xf]
    %v1640 = vld [vmem:[%s1635 + $0x10] sm:$0xf]
    %v1641 = vld [vmem:[%s1635 + $0x14] sm:$0xf]
    %v1642 = vld [vmem:[%s1635 + $0x18] sm:$0xf]
    %v1643 = vld [vmem:[%s1635 + $0x1c] sm:$0xf]
    %v1644 = vld [vmem:[%s1635 + $0x20] sm:$0xf]
    %v1645 = vld [vmem:[%s1635 + $0x24] sm:$0xf]
    %v1646 = vld [vmem:[%s1635 + $0x28] sm:$0xf]
    %v1647 = vld [vmem:[%s1635 + $0x2c] sm:$0xf]
    %v1648 = vld [vmem:[%s1635 + $0x30] sm:$0xf]
    %v1649 = vld [vmem:[%s1635 + $0x34] sm:$0xf]
    %v1650 = vld [vmem:[%s1635 + $0x38] sm:$0xf]
    %v1651 = vld [vmem:[%s1635 + $0x3c] sm:$0xf]
    %v1668 = vunpack.c.l.b16 %v1636
    %v1669 = vunpack.c.l.b16 %v1637
    %v1670 = vunpack.c.l.b16 %v1638
    %v1671 = vunpack.c.l.b16 %v1639
    %v1672 = vunpack.c.l.b16 %v1640
    %v1673 = vunpack.c.l.b16 %v1641
    %v1674 = vunpack.c.l.b16 %v1642
    %v1675 = vunpack.c.l.b16 %v1643
    %v1676 = vunpack.c.l.b16 %v1644
    %v1677 = vunpack.c.l.b16 %v1645
    %v1678 = vunpack.c.l.b16 %v1646
    %v1679 = vunpack.c.l.b16 %v1647
    %v1680 = vunpack.c.l.b16 %v1648
    %v1681 = vunpack.c.l.b16 %v1649
    %v1682 = vunpack.c.l.b16 %v1650
    %v1683 = vunpack.c.l.b16 %v1651
    %v1684 = vpack.c.b16 %v1669, %v1668
    %v1685 = vpack.c.b16 %v1671, %v1670
    %v1686 = vpack.c.b16 %v1673, %v1672
    %v1687 = vpack.c.b16 %v1675, %v1674
    %v1688 = vpack.c.b16 %v1677, %v1676
    %v1689 = vpack.c.b16 %v1679, %v1678
    %v1690 = vpack.c.b16 %v1681, %v1680
    %v1691 = vpack.c.b16 %v1683, %v1682
    %1700 = vmatprep.subr.bf16.mxu0 0
    %1701 = vmatpush1.bf16.msra.mxu0 %v1684
    %1702 = vmatprep.subr.bf16.mxu0 0
    %1703 = vmatpush1.bf16.msra.mxu0 %v1685
    %1704 = vmatprep.subr.bf16.mxu0 0
    %1705 = vmatpush1.bf16.msra.mxu0 %v1686
    %1706 = vmatprep.subr.bf16.mxu0 0
    %1707 = vmatpush1.bf16.msra.mxu0 %v1687
    %1708 = vmatprep.subr.bf16.mxu0 0
    %1709 = vmatpush1.bf16.msra.mxu0 %v1688
    %1710 = vmatprep.subr.bf16.mxu0 0
    %1711 = vmatpush1.bf16.msra.mxu0 %v1689
    %1712 = vmatprep.subr.bf16.mxu0 0
    %1713 = vmatpush1.bf16.msra.mxu0 %v1690
    %1714 = vmatprep.subr.bf16.mxu0 0
    %1715 = vmatpush1.bf16.msra.mxu0 %v1691
    %1716 = vmatprep.subr.bf16.mxu0 0
    %1717 = vmatpush1.bf16.msra.mxu0 0
    %1718 = vmatprep.subr.bf16.mxu0 0
    %1719 = vmatpush1.bf16.msra.mxu0 0
    %1720 = vmatprep.subr.bf16.mxu0 0
    %1721 = vmatpush1.bf16.msra.mxu0 0
    %1722 = vmatprep.subr.bf16.mxu0 0
    %1723 = vmatpush1.bf16.msra.mxu0 0
    %1724 = vmatprep.subr.bf16.mxu0 0
    %1725 = vmatpush1.bf16.msra.mxu0 0
    %1726 = vmatprep.subr.bf16.mxu0 0
    %1727 = vmatpush1.bf16.msra.mxu0 0
    %1728 = vmatprep.subr.bf16.mxu0 0
    %1729 = vmatpush1.bf16.msra.mxu0 0
    %1730 = vmatprep.subr.bf16.mxu0 0
    %1731 = vmatpush1.bf16.msra.mxu0 0
    %1732 = vmatprep.mubr.bf16.mxu0 0
    %1733 = vmatmul.mubr.bf16.gmra.mrb[0].mxu0 %v1406
    %v1734 = vpop.f32.mrb[0].mxu0
    %v1735 = vadd.f32 0.0, %v1734
    %v1736 = vpop.f32.mrb[0].mxu0
    %v1737 = vpop.f32.mrb[0].mxu0
    %v1738 = vadd.f32 0.0, %v1737
    %v1739 = vpop.f32.mrb[0].mxu0
    %1740 = vmatprep.mubr.bf16.mxu0 0
    %1741 = vmatmul.mubr.bf16.gmra.mrb[0].mxu0 %v1407
    %v1742 = vpop.f32.mrb[0].mxu0
    %v1743 = vadd.f32 0.0, %v1742
    %v1744 = vpop.f32.mrb[0].mxu0
    %v1745 = vpop.f32.mrb[0].mxu0
    %v1746 = vadd.f32 0.0, %v1745
    %v1747 = vpop.f32.mrb[0].mxu0
    %1748 = vdwg.mxu0
    %v1749 = vadd.f32 %v1621, %v1735
    %v1750 = vadd.f32 %v1624, %v1738
    %v1751 = vadd.f32 %v1629, %v1743
    %v1752 = vadd.f32 %v1632, %v1746
    %v1753 = vadd.f32 %v1749, %v1750
    %v1754 = vadd.f32 %v1753, %v1751
    %v1755 = vadd.f32 %v1754, %v1752
    %v1756 = vrot.slane %v1755, 4
    %v1757 = vadd.f32 %v1755, %v1756
    %v1758 = vrot.slane %v1757, 2
    %v1759 = vadd.f32 %v1757, %v1758
    %v1760 = vrot.slane %v1759, 1
    %v1761 = vadd.f32 %v1759, %v1760
    %1762 = vmatprep.subr.mxu0 0.0
    %1763 = vmatpush1.msra.mxu0 %v1087
    %1764 = vmatprep.subr.mxu0 0.0
    %1765 = vmatpush1.msra.mxu0 %v1088
    %1766 = vmatprep.subr.mxu0 0.0
    %1767 = vmatpush1.msra.mxu0 %v1089
    %1768 = vmatprep.subr.mxu0 0.0
    %1769 = vmatpush1.msra.mxu0 %v1090
    %1770 = vmatprep.subr.mxu0 0.0
    %1771 = vmatpush1.msra.mxu0 %v1091
    %1772 = vmatprep.subr.mxu0 0.0
    %1773 = vmatpush1.msra.mxu0 %v1092
    %1774 = vmatprep.subr.mxu0 0.0
    %1775 = vmatpush1.msra.mxu0 %v1093
    %1776 = vmatprep.subr.mxu0 0.0
    %1777 = vmatpush1.msra.mxu0 %v1094
    %1778 = vmatprep.subr.mxu0 0.0
    %1779 = vmatpush1.msra.mxu0 %v1095
    %1780 = vmatprep.subr.mxu0 0.0
    %1781 = vmatpush1.msra.mxu0 %v1096
    %1782 = vmatprep.subr.mxu0 0.0
    %1783 = vmatpush1.msra.mxu0 %v1097
    %1784 = vmatprep.subr.mxu0 0.0
    %1785 = vmatpush1.msra.mxu0 %v1098
    %1786 = vmatprep.subr.mxu0 0.0
    %1787 = vmatpush1.msra.mxu0 %v1099
    %1788 = vmatprep.subr.mxu0 0.0
    %1789 = vmatpush1.msra.mxu0 %v1100
    %1790 = vmatprep.subr.mxu0 0.0
    %1791 = vmatpush1.msra.mxu0 %v1101
    %1792 = vmatprep.subr.mxu0 0.0
    %1793 = vmatpush1.msra.mxu0 %v1102
    %1794 = vmatprep.subr.mxu0 0.0
    %1795 = vmatpush1.msra.mxu0 0.0
    %1796 = vmatprep.subr.mxu0 0.0
    %1797 = vmatpush1.msra.mxu0 0.0
    %1798 = vmatprep.subr.mxu0 0.0
    %1799 = vmatpush1.msra.mxu0 0.0
    %1800 = vmatprep.subr.mxu0 0.0
    %1801 = vmatpush1.msra.mxu0 0.0
    %1802 = vmatprep.subr.mxu0 0.0
    %1803 = vmatpush1.msra.mxu0 0.0
    %1804 = vmatprep.subr.mxu0 0.0
    %1805 = vmatpush1.msra.mxu0 0.0
    %1806 = vmatprep.subr.mxu0 0.0
    %1807 = vmatpush1.msra.mxu0 0.0
    %1808 = vmatprep.subr.mxu0 0.0
    %1809 = vmatpush1.msra.mxu0 0.0
    %1810 = vmatprep.subr.mxu0 0.0
    %1811 = vmatpush1.msra.mxu0 0.0
    %1812 = vmatprep.subr.mxu0 0.0
    %1813 = vmatpush1.msra.mxu0 0.0
    %1814 = vmatprep.subr.mxu0 0.0
    %1815 = vmatpush1.msra.mxu0 0.0
    %1816 = vmatprep.subr.mxu0 0.0
    %1817 = vmatpush1.msra.mxu0 0.0
    %1818 = vmatprep.subr.mxu0 0.0
    %1819 = vmatpush1.msra.mxu0 0.0
    %1820 = vmatprep.subr.mxu0 0.0
    %1821 = vmatpush1.msra.mxu0 0.0
    %1822 = vmatprep.subr.mxu0 0.0
    %1823 = vmatpush1.msra.mxu0 0.0
    %1824 = vmatprep.subr.mxu0 0.0
    %1825 = vmatpush1.msra.mxu0 0.0
    %1826 = vmatprep.mubr.f32.mxu0 0.0
    %1827 = vmatmul.mubr.f32.gmra.mrb[0].mxu0 %v1761
    %v1828 = vpop.f32.mrb[0].mxu0
    %v1829 = vadd.f32 0.0, %v1828
    %v1830 = vpop.f32.mrb[0].mxu0
    %1831 = vdwg.mxu0
    %v1832 = vmul.f32 %v1829, 0.001953125
    %v1833 = vlaneseq
    %v1834 = vshrl.u32 %v1833, 7
    %v1835 = vsub.s32 0, %v1834
    %v1836 = vrot.slane %v1832, %v1835
    %v1837 = vsub.f32 %v1749, %v1836
    %v1838 = vsub.f32 %v1750, %v1836
    %v1839 = vsub.f32 %v1751, %v1836
    %v1840 = vsub.f32 %v1752, %v1836
    %v1841 = vmul.f32 %v1837, %v1837
    %v1842 = vmul.f32 %v1838, %v1838
    %v1843 = vmul.f32 %v1839, %v1839
    %v1844 = vmul.f32 %v1840, %v1840
    %v1845 = vadd.f32 %v1841, %v1842
    %v1846 = vadd.f32 %v1845, %v1843
    %v1847 = vadd.f32 %v1846, %v1844
    %v1848 = vrot.slane %v1847, 4
    %v1849 = vadd.f32 %v1847, %v1848
    %v1850 = vrot.slane %v1849, 2
    %v1851 = vadd.f32 %v1849, %v1850
    %v1852 = vrot.slane %v1851, 1
    %v1853 = vadd.f32 %v1851, %v1852
    %1854 = vmatprep.subr.mxu0 0.0
    %1855 = vmatpush1.msra.mxu0 %v1087
    %1856 = vmatprep.subr.mxu0 0.0
    %1857 = vmatpush1.msra.mxu0 %v1088
    %1858 = vmatprep.subr.mxu0 0.0
    %1859 = vmatpush1.msra.mxu0 %v1089
    %1860 = vmatprep.subr.mxu0 0.0
    %1861 = vmatpush1.msra.mxu0 %v1090
    %1862 = vmatprep.subr.mxu0 0.0
    %1863 = vmatpush1.msra.mxu0 %v1091
    %1864 = vmatprep.subr.mxu0 0.0
    %1865 = vmatpush1.msra.mxu0 %v1092
    %1866 = vmatprep.subr.mxu0 0.0
    %1867 = vmatpush1.msra.mxu0 %v1093
    %1868 = vmatprep.subr.mxu0 0.0
    %1869 = vmatpush1.msra.mxu0 %v1094
    %1870 = vmatprep.subr.mxu0 0.0
    %1871 = vmatpush1.msra.mxu0 %v1095
    %1872 = vmatprep.subr.mxu0 0.0
    %1873 = vmatpush1.msra.mxu0 %v1096
    %1874 = vmatprep.subr.mxu0 0.0
    %1875 = vmatpush1.msra.mxu0 %v1097
    %1876 = vmatprep.subr.mxu0 0.0
    %1877 = vmatpush1.msra.mxu0 %v1098
    %1878 = vmatprep.subr.mxu0 0.0
    %1879 = vmatpush1.msra.mxu0 %v1099
    %1880 = vmatprep.subr.mxu0 0.0
    %1881 = vmatpush1.msra.mxu0 %v1100
    %1882 = vmatprep.subr.mxu0 0.0
    %1883 = vmatpush1.msra.mxu0 %v1101
    %1884 = vmatprep.subr.mxu0 0.0
    %1885 = vmatpush1.msra.mxu0 %v1102
    %1886 = vmatprep.subr.mxu0 0.0
    %1887 = vmatpush1.msra.mxu0 0.0
    %1888 = vmatprep.subr.mxu0 0.0
    %1889 = vmatpush1.msra.mxu0 0.0
    %1890 = vmatprep.subr.mxu0 0.0
    %1891 = vmatpush1.msra.mxu0 0.0
    %1892 = vmatprep.subr.mxu0 0.0
    %1893 = vmatpush1.msra.mxu0 0.0
    %1894 = vmatprep.subr.mxu0 0.0
    %1895 = vmatpush1.msra.mxu0 0.0
    %1896 = vmatprep.subr.mxu0 0.0
    %1897 = vmatpush1.msra.mxu0 0.0
    %1898 = vmatprep.subr.mxu0 0.0
    %1899 = vmatpush1.msra.mxu0 0.0
    %1900 = vmatprep.subr.mxu0 0.0
    %1901 = vmatpush1.msra.mxu0 0.0
    %1902 = vmatprep.subr.mxu0 0.0
    %1903 = vmatpush1.msra.mxu0 0.0
    %1904 = vmatprep.subr.mxu0 0.0
    %1905 = vmatpush1.msra.mxu0 0.0
    %1906 = vmatprep.subr.mxu0 0.0
    %1907 = vmatpush1.msra.mxu0 0.0
    %1908 = vmatprep.subr.mxu0 0.0
    %1909 = vmatpush1.msra.mxu0 0.0
    %1910 = vmatprep.subr.mxu0 0.0
    %1911 = vmatpush1.msra.mxu0 0.0
    %1912 = vmatprep.subr.mxu0 0.0
    %1913 = vmatpush1.msra.mxu0 0.0
    %1914 = vmatprep.subr.mxu0 0.0
    %1915 = vmatpush1.msra.mxu0 0.0
    %1916 = vmatprep.subr.mxu0 0.0
    %1917 = vmatpush1.msra.mxu0 0.0
    %1918 = vmatprep.mubr.f32.mxu0 0.0
    %1919 = vmatmul.mubr.f32.gmra.mrb[0].mxu0 %v1853
    %v1920 = vpop.f32.mrb[0].mxu0
    %v1921 = vadd.f32 0.0, %v1920
    %v1922 = vpop.f32.mrb[0].mxu0
    %1923 = vdwg.mxu0
    %v1924 = vmul.f32 %v1921, 0.001953125
    %v1925 = vld [vmem:[%s12] sm:$0x1]
    %v1926 = vadd.f32 %v1924, 1e-05
    %v1927 = vrsqrt.pop %v1926
    %v1928 = vmul.f32 %v1925, %v1927
    %v1930 = vlaneseq
    %v1931 = vshrl.u32 %v1930, 7
    %v1932 = vsub.s32 0, %v1931
    %v1933 = vrot.slane %v1928, %v1932
    %v1935 = vmul.f32 %v1837, %v1933
    %v1936 = vmul.f32 %v1838, %v1933
    %v1937 = vmul.f32 %v1839, %v1933
    %v1938 = vmul.f32 %v1840, %v1933
    %v1939 = vld [vmem:[%s13] sm:$0x1]
    %v1941 = vlaneseq
    %v1942 = vshrl.u32 %v1941, 7
    %v1943 = vsub.s32 0, %v1942
    %v1944 = vrot.slane %v1939, %v1943
    %v1946 = vadd.f32 %v1935, %v1944
    %v1947 = vadd.f32 %v1936, %v1944
    %v1948 = vadd.f32 %v1937, %v1944
    %v1949 = vadd.f32 %v1938, %v1944
    %v1950 = vmax.f32 %v1946, 0.0
    %v1951 = vmax.f32 %v1947, 0.0
    %v1952 = vmax.f32 %v1948, 0.0
    %v1953 = vmax.f32 %v1949, 0.0
    %1954 = vst [vmem:[%s14] sm:$0xff] %v1950
    %1955 = vst [vmem:[%s14 + $0x8] sm:$0xff] %v1951
    %1956 = vst [vmem:[%s14 + $0x10] sm:$0xff] %v1952
    %1957 = vst [vmem:[%s14 + $0x18] sm:$0xff] %v1953
    // Predicated region
    $region66: #{base_ms_forward.1} parent=1 // pred_check
      _
    $region67: #{base_ms_forward.1} parent=1 // pred_check_branch
      %1959 = sbr.rel (0) target = $region69
    $region68: #{base_ms_forward.1} parent=1 // pred_region
      _
    $region69: #{base_ms_forward.1} parent=1 // pred_fallthru
      _
    // Predicated region
    $region70: #{base_ms_forward.1} parent=1 // pred_check
      _
    $region71: #{base_ms_forward.1} parent=1 // pred_check_branch
      %1961 = sbr.rel (0) target = $region73
    $region72: #{base_ms_forward.1} parent=1 // pred_region
      _
    $region73: #{base_ms_forward.1} parent=1 // pred_fallthru
      _
    %1962 = vsyncpa [#allocation3], 1
    %1963 = vsyncpa [#allocation5], 1

</llo_original>
